<compile_context>
chip_gen: v5e
topology: v5e:2x2
jax: 0.10.0
libtpu: 0.0.40
codegen_flags: <defaults>
</compile_context>

<pallas_src>
import functools

import jax
import jax.numpy as jnp
from jax import lax
from jax.experimental import pallas as pl
from jax.experimental.pallas import tpu as pltpu

EPS = 1e-5
BN_DIMS = [24, 96, 384, 96, 24, 6]  # BatchNorm1d feature widths, forward order


def _layer_dims(n_components):
    # (fan_in, fan_out) of every nn.Linear, in forward order.
    return [
        (6, 24), (24, 96), (96, 384),       # en_fc0 linears (each -> BN -> Tanh)
        (384, n_components),                # en_fc (code head; bias kept)
        (n_components, 384),                # de_fc (bias cancelled by next BN)
        (384, 96), (96, 24), (24, 6),       # de_fc2 linears (each -> BN -> act)
    ]


def _padlane(f):
    # round a feature width up to a multiple of 128 lanes
    return ((f + 127) // 128) * 128


def _padded_dims(n_components):
    """Padded (fan_in, fan_out) per layer: every activation is a full-lane-width
    slab.  fin_p(i) == fout_p(i-1) by construction, so no re-slicing between
    layers is ever needed.  Layer 0's fan-in matches the 8-wide padded input."""
    dims = _layer_dims(n_components)
    dims_p = []
    for i, (fin, fout) in enumerate(dims):
        fin_p = 8 if i == 0 else _padlane(fin)
        dims_p.append((fin_p, _padlane(fout)))
    return dims, dims_p


# --------------------------------------------------------------------------- #
# Kernel
# --------------------------------------------------------------------------- #
def _make_kernel(n_components, dims_p, w_offsets, batch):
    nc = n_components
    nc_p = dims_p[3][1]           # padded code lane width
    inv_b = 1.0 / float(batch)

    def kernel(x_ref, w_ref, v_ref, code_ref, dec_ref):
        # ones row staged once: pushes all BN batch reductions onto the MXU.
        ones_row = jnp.ones((1, batch), jnp.float32)

        def W(i):
            off = w_offsets[i]
            fin_p, fout_p = dims_p[i]
            return w_ref[off:off + fin_p, 0:fout_p]      # static, tile-aligned

        def V(row, fp):
            return v_ref[row:row + 1, 0:fp]              # (1, fp) row vector

        def bn(h, gamma, beta):
            # PyTorch BatchNorm1d training mode (batch mean, biased variance),
            # folded into one per-feature scale/shift.  Batch sums via MXU.
            s = jnp.dot(ones_row, h, preferred_element_type=jnp.float32)
            ssq = jnp.dot(ones_row, h * h, preferred_element_type=jnp.float32)
            mean = s * inv_b
            var = jnp.maximum(ssq * inv_b - mean * mean, 0.0)
            scale = gamma * lax.rsqrt(var + EPS)
            shift = beta - mean * scale
            return h * scale + shift

        h = x_ref[...]                                   # (B, 8): 6 feats + pad

        # ---- encoder trunk: Linear (bias folded away by BN) -> BN -> Tanh, x3
        for li, row in ((0, 1), (1, 3), (2, 5)):
            fp = dims_p[li][1]
            h = jnp.dot(h, W(li), preferred_element_type=jnp.float32)
            h = jnp.tanh(bn(h, V(row, fp), V(row + 1, fp)))

        # ---- bottleneck: code head has no BN, so keep its bias.
        #      Padded code lanes stay exactly 0 (zero W cols + zero bias pad).
        code = jnp.dot(h, W(3), preferred_element_type=jnp.float32) + V(0, nc_p)

        # ---- de_fc (its bias is batch-constant downstream, cancelled by BN)
        d = jnp.dot(code, W(4), preferred_element_type=jnp.float32)

        # ---- decoder trunk: Linear -> BN -> Tanh (x2), Linear -> BN -> Sigmoid
        for li, row in ((5, 7), (6, 9)):
            fp = dims_p[li][1]
            d = jnp.dot(d, W(li), preferred_element_type=jnp.float32)
            d = jnp.tanh(bn(d, V(row, fp), V(row + 1, fp)))
        fp_last = dims_p[7][1]
        d = jnp.dot(d, W(7), preferred_element_type=jnp.float32)
        d = jax.nn.sigmoid(bn(d, V(11, fp_last), V(12, fp_last)))

        # ---- two exact-shape outputs: no zero fill, no wrapper slices.
        code_ref[...] = code[:, :nc].astype(code_ref.dtype)
        dec_ref[...] = d[:, :6].astype(dec_ref.dtype)

    return kernel


# --------------------------------------------------------------------------- #
# Host-side packing / wrapper
# --------------------------------------------------------------------------- #
def init_params(key, n_components):
    """PyTorch-style init: Linear U(+-1/sqrt(fan_in)) for W and b; BN gamma=1,
    beta=0.  Weights stored transposed as (fan_in, fan_out)."""
    dims = _layer_dims(n_components)
    keys = jax.random.split(key, 2 * len(dims))
    linears = []
    for i, (fin, fout) in enumerate(dims):
        bound = 1.0 / float(fin) ** 0.5
        w = jax.random.uniform(keys[2 * i], (fin, fout), jnp.float32, -bound, bound)
        b = jax.random.uniform(keys[2 * i + 1], (fout,), jnp.float32, -bound, bound)
        linears.append((w, b))
    bns = [(jnp.ones((f,), jnp.float32), jnp.zeros((f,), jnp.float32)) for f in BN_DIMS]
    return linears, bns


def pack_params(linears, bns, n_components):
    """Pack the 8 weights into one (rows, lane_w) slab (each W at an 8-aligned
    sublane offset, fan-in/out zero-padded to full lane width) and the code-head
    bias + 6x(gamma, beta) into one small slab.  Biases of BN-preceded linears
    are intentionally NOT packed (train-mode BN cancels them exactly)."""
    dims, dims_p = _padded_dims(n_components)
    lane_w = max(fp for _, fp in dims_p)     # 384 for nc <= 128

    offs, off = [], 0
    for fin_p, _ in dims_p:
        offs.append(off)
        off += fin_p
    w_slab = jnp.zeros((off, lane_w), jnp.float32)
    for (w, _), (fin, fout), o in zip(linears, dims, offs):
        w_slab = w_slab.at[o:o + fin, 0:fout].set(w)

    v_slab = jnp.zeros((16, lane_w), jnp.float32)        # 13 used rows, padded to 16
    v_slab = v_slab.at[0, 0:n_components].set(linears[3][1])   # en_fc bias
    for i, (g, b) in enumerate(bns):
        f = g.shape[0]
        v_slab = v_slab.at[1 + 2 * i, 0:f].set(g)
        v_slab = v_slab.at[2 + 2 * i, 0:f].set(b)
    return w_slab, v_slab, tuple(offs), tuple(dims_p)


def autoencoder_forward(x, w_slab, v_slab, n_components, w_offsets, dims_p):
    """x: (NB, B, 6) — NB independent BatchNorm mini-batches, gridded so weights
    are DMA'd once and both TensorCores can be used on v7x."""
    NB, B, n_in = x.shape
    nc = n_components
    dims = _layer_dims(nc)
    assert n_in == dims[0][0]
    x_p = jnp.pad(x, ((0, 0), (0, 0), (0, 8 - n_in)))

    rows, lane_w = w_slab.shape
    vrows, _ = v_slab.shape

    flops = 2 * NB * B * (sum(fin * fout for fin, fout in dims) + 2 * sum(BN_DIMS))
    transcendentals = NB * B * sum(BN_DIMS)
    bytes_accessed = 4 * (x_p.size + w_slab.size + v_slab.size + NB * B * (nc + 6))

    code, decoded = pl.pallas_call(
        _make_kernel(nc, dims_p, w_offsets, B),
        out_shape=(jax.ShapeDtypeStruct((NB, B, nc), jnp.float32),
                   jax.ShapeDtypeStruct((NB, B, 6), jnp.float32)),
        grid_spec=pltpu.PrefetchScalarGridSpec(
            num_scalar_prefetch=0,
            grid=(NB,),
            in_specs=[
                pl.BlockSpec((None, B, 8), lambda i: (i, 0, 0)),
                pl.BlockSpec((rows, lane_w), lambda i: (0, 0)),    # resident weights
                pl.BlockSpec((vrows, lane_w), lambda i: (0, 0)),   # resident gamma/beta/bias
            ],
            out_specs=[
                pl.BlockSpec((None, B, nc), lambda i: (i, 0, 0)),
                pl.BlockSpec((None, B, 6), lambda i: (i, 0, 0)),
            ],
        ),
        compiler_params=pltpu.CompilerParams(
            dimension_semantics=("parallel",),
            vmem_limit_bytes=32 * 1024 * 1024,
        ),
        cost_estimate=pl.CostEstimate(
            flops=flops, transcendentals=transcendentals, bytes_accessed=bytes_accessed),
    )(x_p, w_slab, v_slab)
    return code, decoded


# --------------------------------------------------------------------------- #
# Pure-JAX reference with full PyTorch semantics (all biases kept)
# --------------------------------------------------------------------------- #
def autoencoder_reference(x, linears, bns):
    # TODO(synk): train-mode BatchNorm1d running_mean/var momentum updates are
    # stateful side effects not reproduced here (forward outputs only).
    def bn(h, g, b):
        mean = jnp.mean(h, axis=0, keepdims=True)
        var = jnp.mean((h - mean) ** 2, axis=0, keepdims=True)
        return g * (h - mean) / jnp.sqrt(var + EPS) + b

    (w0, b0), (w1, b1), (w2, b2), (we, be), (wd, bd), (w3, b3), (w4, b4), (w5, b5) = linears
    (g0, bb0), (g1, bb1), (g2, bb2), (g3, bb3), (g4, bb4), (g5, bb5) = bns
    h = jnp.tanh(bn(x @ w0 + b0, g0, bb0))
    h = jnp.tanh(bn(h @ w1 + b1, g1, bb1))
    h = jnp.tanh(bn(h @ w2 + b2, g2, bb2))
    code = h @ we + be
    d = code @ wd + bd
    d = jnp.tanh(bn(d @ w3 + b3, g3, bb3))
    d = jnp.tanh(bn(d @ w4 + b4, g4, bb4))
    d = jax.nn.sigmoid(bn(d @ w5 + b5, g5, bb5))
    return code, d


if __name__ == "__main__":
    n_components = 16
    NB, B = 4, 64     # 4 independent BN mini-batches of 64 rows each
    key = jax.random.PRNGKey(0)
    kx, kp = jax.random.split(key)
    x = jax.random.uniform(kx, (NB, B, 6), jnp.float32)   # data in [0,1]

    linears, bns = init_params(kp, n_components)
    w_slab, v_slab, w_offsets, dims_p = pack_params(linears, bns, n_components)

    fwd = jax.jit(functools.partial(
        autoencoder_forward, n_components=n_components,
        w_offsets=w_offsets, dims_p=dims_p))
    code, decoded = fwd(x, w_slab, v_slab)
    jax.block_until_ready((code, decoded))

    # Validate against full-bias PyTorch-semantics reference, per BN batch.
    refs = [autoencoder_reference(x[i], linears, bns) for i in range(NB)]
    code_ref = jnp.stack([r[0] for r in refs])
    dec_ref = jnp.stack([r[1] for r in refs])
    assert code.shape == (NB, B, n_components) and decoded.shape == (NB, B, 6)
    assert jnp.allclose(code, code_ref, atol=1e-4, rtol=1e-4)
    assert jnp.allclose(decoded, dec_ref, atol=1e-4, rtol=1e-4)
    print("KERNEL_OK")
</pallas_src>

<mosaic_0001>
module attributes {stable_mosaic.version = 11 : i64} {
  func.func @kernel(%arg0: i32, %arg1: memref<1x64x8xf32, #tpu.memory_space<vmem>>, %arg2: memref<1416x384xf32, #tpu.memory_space<vmem>>, %arg3: memref<16x384xf32, #tpu.memory_space<vmem>>, %arg4: memref<1x64x16xf32, #tpu.memory_space<vmem>>, %arg5: memref<1x64x6xf32, #tpu.memory_space<vmem>>) attributes {dimension_semantics = [#tpu.dimension_semantics<parallel>], iteration_bounds = array<i64: 4>, scalar_prefetch = 0 : i64, scratch_operands = 0 : i64, tpu.core_type = #tpu.core_type<tc>, window_params = [{transform_indices = @transform_0, window_bounds = array<i64: 1, 64, 8>}, {pipeline_mode = #tpu.pipeline_mode<synchronous>, transform_indices = @transform_1, window_bounds = array<i64: 1416, 384>}, {pipeline_mode = #tpu.pipeline_mode<synchronous>, transform_indices = @transform_2, window_bounds = array<i64: 16, 384>}, {transform_indices = @transform_3, window_bounds = array<i64: 1, 64, 16>}, {transform_indices = @transform_4, window_bounds = array<i64: 1, 64, 6>}]} {
    %cst = arith.constant 1.000000e+00 : f32
    %0 = vector.broadcast %cst : f32 to vector<1x64xf32>
    %c0 = arith.constant 0 : index
    %c0_0 = arith.constant 0 : index
    %c0_1 = arith.constant 0 : index
    %1 = vector.load %arg1[%c0, %c0_0, %c0_1] : memref<1x64x8xf32, #tpu.memory_space<vmem>>, vector<1x64x8xf32>
    %2 = vector.shape_cast %1 : vector<1x64x8xf32> to vector<64x8xf32>
    %c0_2 = arith.constant 0 : index
    %c0_3 = arith.constant 0 : index
    %3 = vector.load %arg2[%c0_2, %c0_3] : memref<1416x384xf32, #tpu.memory_space<vmem>>, vector<8x128xf32>
    %cst_4 = arith.constant dense<0.000000e+00> : vector<64x128xf32>
    %4 = tpu.matmul %2, %3, %cst_4 {dimension_numbers = #tpu.dot_dimension_numbers<[1], [0], [0], [1], [0, 0, 1, 1], [], []>} : vector<64x8xf32>, vector<8x128xf32>, vector<64x128xf32> -> vector<64x128xf32>
    %c1 = arith.constant 1 : index
    %c0_5 = arith.constant 0 : index
    %5 = vector.load %arg3[%c1, %c0_5] : memref<16x384xf32, #tpu.memory_space<vmem>>, vector<1x128xf32>
    %c2 = arith.constant 2 : index
    %c0_6 = arith.constant 0 : index
    %6 = vector.load %arg3[%c2, %c0_6] : memref<16x384xf32, #tpu.memory_space<vmem>>, vector<1x128xf32>
    %cst_7 = arith.constant dense<0.000000e+00> : vector<1x128xf32>
    %7 = tpu.matmul %0, %4, %cst_7 {dimension_numbers = #tpu.dot_dimension_numbers<[1], [0], [0], [1], [0, 0, 1, 1], [], []>} : vector<1x64xf32>, vector<64x128xf32>, vector<1x128xf32> -> vector<1x128xf32>
    %8 = arith.mulf %4, %4 : vector<64x128xf32>
    %cst_8 = arith.constant dense<0.000000e+00> : vector<1x128xf32>
    %9 = tpu.matmul %0, %8, %cst_8 {dimension_numbers = #tpu.dot_dimension_numbers<[1], [0], [0], [1], [0, 0, 1, 1], [], []>} : vector<1x64xf32>, vector<64x128xf32>, vector<1x128xf32> -> vector<1x128xf32>
    %cst_9 = arith.constant 1.562500e-02 : f32
    %10 = vector.broadcast %cst_9 : f32 to vector<1x128xf32>
    %11 = arith.mulf %7, %10 : vector<1x128xf32>
    %cst_10 = arith.constant 1.562500e-02 : f32
    %12 = vector.broadcast %cst_10 : f32 to vector<1x128xf32>
    %13 = arith.mulf %9, %12 : vector<1x128xf32>
    %14 = arith.mulf %11, %11 : vector<1x128xf32>
    %15 = arith.subf %13, %14 : vector<1x128xf32>
    %cst_11 = arith.constant 0.000000e+00 : f32
    %16 = vector.broadcast %cst_11 : f32 to vector<1x128xf32>
    %17 = arith.maximumf %15, %16 : vector<1x128xf32>
    %cst_12 = arith.constant 9.99999974E-6 : f32
    %18 = vector.broadcast %cst_12 : f32 to vector<1x128xf32>
    %19 = arith.addf %17, %18 : vector<1x128xf32>
    %20 = math.rsqrt %19 : vector<1x128xf32>
    %21 = arith.mulf %5, %20 : vector<1x128xf32>
    %22 = arith.mulf %11, %21 : vector<1x128xf32>
    %23 = arith.subf %6, %22 : vector<1x128xf32>
    %24 = vector.broadcast %21 : vector<1x128xf32> to vector<64x128xf32>
    %25 = arith.mulf %4, %24 : vector<64x128xf32>
    %26 = vector.broadcast %23 : vector<1x128xf32> to vector<64x128xf32>
    %27 = arith.addf %25, %26 : vector<64x128xf32>
    %28 = math.tanh %27 : vector<64x128xf32>
    %c8 = arith.constant 8 : index
    %c0_13 = arith.constant 0 : index
    %29 = vector.load %arg2[%c8, %c0_13] : memref<1416x384xf32, #tpu.memory_space<vmem>>, vector<128x128xf32>
    %cst_14 = arith.constant dense<0.000000e+00> : vector<64x128xf32>
    %30 = tpu.matmul %28, %29, %cst_14 {dimension_numbers = #tpu.dot_dimension_numbers<[1], [0], [0], [1], [0, 0, 1, 1], [], []>} : vector<64x128xf32>, vector<128x128xf32>, vector<64x128xf32> -> vector<64x128xf32>
    %c3 = arith.constant 3 : index
    %c0_15 = arith.constant 0 : index
    %31 = vector.load %arg3[%c3, %c0_15] : memref<16x384xf32, #tpu.memory_space<vmem>>, vector<1x128xf32>
    %c4 = arith.constant 4 : index
    %c0_16 = arith.constant 0 : index
    %32 = vector.load %arg3[%c4, %c0_16] : memref<16x384xf32, #tpu.memory_space<vmem>>, vector<1x128xf32>
    %cst_17 = arith.constant dense<0.000000e+00> : vector<1x128xf32>
    %33 = tpu.matmul %0, %30, %cst_17 {dimension_numbers = #tpu.dot_dimension_numbers<[1], [0], [0], [1], [0, 0, 1, 1], [], []>} : vector<1x64xf32>, vector<64x128xf32>, vector<1x128xf32> -> vector<1x128xf32>
    %34 = arith.mulf %30, %30 : vector<64x128xf32>
    %cst_18 = arith.constant dense<0.000000e+00> : vector<1x128xf32>
    %35 = tpu.matmul %0, %34, %cst_18 {dimension_numbers = #tpu.dot_dimension_numbers<[1], [0], [0], [1], [0, 0, 1, 1], [], []>} : vector<1x64xf32>, vector<64x128xf32>, vector<1x128xf32> -> vector<1x128xf32>
    %cst_19 = arith.constant 1.562500e-02 : f32
    %36 = vector.broadcast %cst_19 : f32 to vector<1x128xf32>
    %37 = arith.mulf %33, %36 : vector<1x128xf32>
    %cst_20 = arith.constant 1.562500e-02 : f32
    %38 = vector.broadcast %cst_20 : f32 to vector<1x128xf32>
    %39 = arith.mulf %35, %38 : vector<1x128xf32>
    %40 = arith.mulf %37, %37 : vector<1x128xf32>
    %41 = arith.subf %39, %40 : vector<1x128xf32>
    %cst_21 = arith.constant 0.000000e+00 : f32
    %42 = vector.broadcast %cst_21 : f32 to vector<1x128xf32>
    %43 = arith.maximumf %41, %42 : vector<1x128xf32>
    %cst_22 = arith.constant 9.99999974E-6 : f32
    %44 = vector.broadcast %cst_22 : f32 to vector<1x128xf32>
    %45 = arith.addf %43, %44 : vector<1x128xf32>
    %46 = math.rsqrt %45 : vector<1x128xf32>
    %47 = arith.mulf %31, %46 : vector<1x128xf32>
    %48 = arith.mulf %37, %47 : vector<1x128xf32>
    %49 = arith.subf %32, %48 : vector<1x128xf32>
    %50 = vector.broadcast %47 : vector<1x128xf32> to vector<64x128xf32>
    %51 = arith.mulf %30, %50 : vector<64x128xf32>
    %52 = vector.broadcast %49 : vector<1x128xf32> to vector<64x128xf32>
    %53 = arith.addf %51, %52 : vector<64x128xf32>
    %54 = math.tanh %53 : vector<64x128xf32>
    %c136 = arith.constant 136 : index
    %c0_23 = arith.constant 0 : index
    %55 = vector.load %arg2[%c136, %c0_23] : memref<1416x384xf32, #tpu.memory_space<vmem>>, vector<128x384xf32>
    %cst_24 = arith.constant dense<0.000000e+00> : vector<64x384xf32>
    %56 = tpu.matmul %54, %55, %cst_24 {dimension_numbers = #tpu.dot_dimension_numbers<[1], [0], [0], [1], [0, 0, 1, 1], [], []>} : vector<64x128xf32>, vector<128x384xf32>, vector<64x384xf32> -> vector<64x384xf32>
    %c5 = arith.constant 5 : index
    %c0_25 = arith.constant 0 : index
    %57 = vector.load %arg3[%c5, %c0_25] : memref<16x384xf32, #tpu.memory_space<vmem>>, vector<1x384xf32>
    %c6 = arith.constant 6 : index
    %c0_26 = arith.constant 0 : index
    %58 = vector.load %arg3[%c6, %c0_26] : memref<16x384xf32, #tpu.memory_space<vmem>>, vector<1x384xf32>
    %cst_27 = arith.constant dense<0.000000e+00> : vector<1x384xf32>
    %59 = tpu.matmul %0, %56, %cst_27 {dimension_numbers = #tpu.dot_dimension_numbers<[1], [0], [0], [1], [0, 0, 1, 1], [], []>} : vector<1x64xf32>, vector<64x384xf32>, vector<1x384xf32> -> vector<1x384xf32>
    %60 = arith.mulf %56, %56 : vector<64x384xf32>
    %cst_28 = arith.constant dense<0.000000e+00> : vector<1x384xf32>
    %61 = tpu.matmul %0, %60, %cst_28 {dimension_numbers = #tpu.dot_dimension_numbers<[1], [0], [0], [1], [0, 0, 1, 1], [], []>} : vector<1x64xf32>, vector<64x384xf32>, vector<1x384xf32> -> vector<1x384xf32>
    %cst_29 = arith.constant 1.562500e-02 : f32
    %62 = vector.broadcast %cst_29 : f32 to vector<1x384xf32>
    %63 = arith.mulf %59, %62 : vector<1x384xf32>
    %cst_30 = arith.constant 1.562500e-02 : f32
    %64 = vector.broadcast %cst_30 : f32 to vector<1x384xf32>
    %65 = arith.mulf %61, %64 : vector<1x384xf32>
    %66 = arith.mulf %63, %63 : vector<1x384xf32>
    %67 = arith.subf %65, %66 : vector<1x384xf32>
    %cst_31 = arith.constant 0.000000e+00 : f32
    %68 = vector.broadcast %cst_31 : f32 to vector<1x384xf32>
    %69 = arith.maximumf %67, %68 : vector<1x384xf32>
    %cst_32 = arith.constant 9.99999974E-6 : f32
    %70 = vector.broadcast %cst_32 : f32 to vector<1x384xf32>
    %71 = arith.addf %69, %70 : vector<1x384xf32>
    %72 = math.rsqrt %71 : vector<1x384xf32>
    %73 = arith.mulf %57, %72 : vector<1x384xf32>
    %74 = arith.mulf %63, %73 : vector<1x384xf32>
    %75 = arith.subf %58, %74 : vector<1x384xf32>
    %76 = vector.broadcast %73 : vector<1x384xf32> to vector<64x384xf32>
    %77 = arith.mulf %56, %76 : vector<64x384xf32>
    %78 = vector.broadcast %75 : vector<1x384xf32> to vector<64x384xf32>
    %79 = arith.addf %77, %78 : vector<64x384xf32>
    %80 = math.tanh %79 : vector<64x384xf32>
    %c264 = arith.constant 264 : index
    %c0_33 = arith.constant 0 : index
    %81 = vector.load %arg2[%c264, %c0_33] : memref<1416x384xf32, #tpu.memory_space<vmem>>, vector<384x128xf32>
    %cst_34 = arith.constant dense<0.000000e+00> : vector<64x128xf32>
    %82 = tpu.matmul %80, %81, %cst_34 {dimension_numbers = #tpu.dot_dimension_numbers<[1], [0], [0], [1], [0, 0, 1, 1], [], []>} : vector<64x384xf32>, vector<384x128xf32>, vector<64x128xf32> -> vector<64x128xf32>
    %c0_35 = arith.constant 0 : index
    %c0_36 = arith.constant 0 : index
    %83 = vector.load %arg3[%c0_35, %c0_36] : memref<16x384xf32, #tpu.memory_space<vmem>>, vector<1x128xf32>
    %84 = vector.broadcast %83 : vector<1x128xf32> to vector<64x128xf32>
    %85 = arith.addf %82, %84 : vector<64x128xf32>
    %c648 = arith.constant 648 : index
    %c0_37 = arith.constant 0 : index
    %86 = vector.load %arg2[%c648, %c0_37] : memref<1416x384xf32, #tpu.memory_space<vmem>>, vector<128x384xf32>
    %cst_38 = arith.constant dense<0.000000e+00> : vector<64x384xf32>
    %87 = tpu.matmul %85, %86, %cst_38 {dimension_numbers = #tpu.dot_dimension_numbers<[1], [0], [0], [1], [0, 0, 1, 1], [], []>} : vector<64x128xf32>, vector<128x384xf32>, vector<64x384xf32> -> vector<64x384xf32>
    %c776 = arith.constant 776 : index
    %c0_39 = arith.constant 0 : index
    %88 = vector.load %arg2[%c776, %c0_39] : memref<1416x384xf32, #tpu.memory_space<vmem>>, vector<384x128xf32>
    %cst_40 = arith.constant dense<0.000000e+00> : vector<64x128xf32>
    %89 = tpu.matmul %87, %88, %cst_40 {dimension_numbers = #tpu.dot_dimension_numbers<[1], [0], [0], [1], [0, 0, 1, 1], [], []>} : vector<64x384xf32>, vector<384x128xf32>, vector<64x128xf32> -> vector<64x128xf32>
    %c7 = arith.constant 7 : index
    %c0_41 = arith.constant 0 : index
    %90 = vector.load %arg3[%c7, %c0_41] : memref<16x384xf32, #tpu.memory_space<vmem>>, vector<1x128xf32>
    %c8_42 = arith.constant 8 : index
    %c0_43 = arith.constant 0 : index
    %91 = vector.load %arg3[%c8_42, %c0_43] : memref<16x384xf32, #tpu.memory_space<vmem>>, vector<1x128xf32>
    %cst_44 = arith.constant dense<0.000000e+00> : vector<1x128xf32>
    %92 = tpu.matmul %0, %89, %cst_44 {dimension_numbers = #tpu.dot_dimension_numbers<[1], [0], [0], [1], [0, 0, 1, 1], [], []>} : vector<1x64xf32>, vector<64x128xf32>, vector<1x128xf32> -> vector<1x128xf32>
    %93 = arith.mulf %89, %89 : vector<64x128xf32>
    %cst_45 = arith.constant dense<0.000000e+00> : vector<1x128xf32>
    %94 = tpu.matmul %0, %93, %cst_45 {dimension_numbers = #tpu.dot_dimension_numbers<[1], [0], [0], [1], [0, 0, 1, 1], [], []>} : vector<1x64xf32>, vector<64x128xf32>, vector<1x128xf32> -> vector<1x128xf32>
    %cst_46 = arith.constant 1.562500e-02 : f32
    %95 = vector.broadcast %cst_46 : f32 to vector<1x128xf32>
    %96 = arith.mulf %92, %95 : vector<1x128xf32>
    %cst_47 = arith.constant 1.562500e-02 : f32
    %97 = vector.broadcast %cst_47 : f32 to vector<1x128xf32>
    %98 = arith.mulf %94, %97 : vector<1x128xf32>
    %99 = arith.mulf %96, %96 : vector<1x128xf32>
    %100 = arith.subf %98, %99 : vector<1x128xf32>
    %cst_48 = arith.constant 0.000000e+00 : f32
    %101 = vector.broadcast %cst_48 : f32 to vector<1x128xf32>
    %102 = arith.maximumf %100, %101 : vector<1x128xf32>
    %cst_49 = arith.constant 9.99999974E-6 : f32
    %103 = vector.broadcast %cst_49 : f32 to vector<1x128xf32>
    %104 = arith.addf %102, %103 : vector<1x128xf32>
    %105 = math.rsqrt %104 : vector<1x128xf32>
    %106 = arith.mulf %90, %105 : vector<1x128xf32>
    %107 = arith.mulf %96, %106 : vector<1x128xf32>
    %108 = arith.subf %91, %107 : vector<1x128xf32>
    %109 = vector.broadcast %106 : vector<1x128xf32> to vector<64x128xf32>
    %110 = arith.mulf %89, %109 : vector<64x128xf32>
    %111 = vector.broadcast %108 : vector<1x128xf32> to vector<64x128xf32>
    %112 = arith.addf %110, %111 : vector<64x128xf32>
    %113 = math.tanh %112 : vector<64x128xf32>
    %c1160 = arith.constant 1160 : index
    %c0_50 = arith.constant 0 : index
    %114 = vector.load %arg2[%c1160, %c0_50] : memref<1416x384xf32, #tpu.memory_space<vmem>>, vector<128x128xf32>
    %cst_51 = arith.constant dense<0.000000e+00> : vector<64x128xf32>
    %115 = tpu.matmul %113, %114, %cst_51 {dimension_numbers = #tpu.dot_dimension_numbers<[1], [0], [0], [1], [0, 0, 1, 1], [], []>} : vector<64x128xf32>, vector<128x128xf32>, vector<64x128xf32> -> vector<64x128xf32>
    %c9 = arith.constant 9 : index
    %c0_52 = arith.constant 0 : index
    %116 = vector.load %arg3[%c9, %c0_52] : memref<16x384xf32, #tpu.memory_space<vmem>>, vector<1x128xf32>
    %c10 = arith.constant 10 : index
    %c0_53 = arith.constant 0 : index
    %117 = vector.load %arg3[%c10, %c0_53] : memref<16x384xf32, #tpu.memory_space<vmem>>, vector<1x128xf32>
    %cst_54 = arith.constant dense<0.000000e+00> : vector<1x128xf32>
    %118 = tpu.matmul %0, %115, %cst_54 {dimension_numbers = #tpu.dot_dimension_numbers<[1], [0], [0], [1], [0, 0, 1, 1], [], []>} : vector<1x64xf32>, vector<64x128xf32>, vector<1x128xf32> -> vector<1x128xf32>
    %119 = arith.mulf %115, %115 : vector<64x128xf32>
    %cst_55 = arith.constant dense<0.000000e+00> : vector<1x128xf32>
    %120 = tpu.matmul %0, %119, %cst_55 {dimension_numbers = #tpu.dot_dimension_numbers<[1], [0], [0], [1], [0, 0, 1, 1], [], []>} : vector<1x64xf32>, vector<64x128xf32>, vector<1x128xf32> -> vector<1x128xf32>
    %cst_56 = arith.constant 1.562500e-02 : f32
    %121 = vector.broadcast %cst_56 : f32 to vector<1x128xf32>
    %122 = arith.mulf %118, %121 : vector<1x128xf32>
    %cst_57 = arith.constant 1.562500e-02 : f32
    %123 = vector.broadcast %cst_57 : f32 to vector<1x128xf32>
    %124 = arith.mulf %120, %123 : vector<1x128xf32>
    %125 = arith.mulf %122, %122 : vector<1x128xf32>
    %126 = arith.subf %124, %125 : vector<1x128xf32>
    %cst_58 = arith.constant 0.000000e+00 : f32
    %127 = vector.broadcast %cst_58 : f32 to vector<1x128xf32>
    %128 = arith.maximumf %126, %127 : vector<1x128xf32>
    %cst_59 = arith.constant 9.99999974E-6 : f32
    %129 = vector.broadcast %cst_59 : f32 to vector<1x128xf32>
    %130 = arith.addf %128, %129 : vector<1x128xf32>
    %131 = math.rsqrt %130 : vector<1x128xf32>
    %132 = arith.mulf %116, %131 : vector<1x128xf32>
    %133 = arith.mulf %122, %132 : vector<1x128xf32>
    %134 = arith.subf %117, %133 : vector<1x128xf32>
    %135 = vector.broadcast %132 : vector<1x128xf32> to vector<64x128xf32>
    %136 = arith.mulf %115, %135 : vector<64x128xf32>
    %137 = vector.broadcast %134 : vector<1x128xf32> to vector<64x128xf32>
    %138 = arith.addf %136, %137 : vector<64x128xf32>
    %139 = math.tanh %138 : vector<64x128xf32>
    %c1288 = arith.constant 1288 : index
    %c0_60 = arith.constant 0 : index
    %140 = vector.load %arg2[%c1288, %c0_60] : memref<1416x384xf32, #tpu.memory_space<vmem>>, vector<128x128xf32>
    %cst_61 = arith.constant dense<0.000000e+00> : vector<64x128xf32>
    %141 = tpu.matmul %139, %140, %cst_61 {dimension_numbers = #tpu.dot_dimension_numbers<[1], [0], [0], [1], [0, 0, 1, 1], [], []>} : vector<64x128xf32>, vector<128x128xf32>, vector<64x128xf32> -> vector<64x128xf32>
    %c11 = arith.constant 11 : index
    %c0_62 = arith.constant 0 : index
    %142 = vector.load %arg3[%c11, %c0_62] : memref<16x384xf32, #tpu.memory_space<vmem>>, vector<1x128xf32>
    %c12 = arith.constant 12 : index
    %c0_63 = arith.constant 0 : index
    %143 = vector.load %arg3[%c12, %c0_63] : memref<16x384xf32, #tpu.memory_space<vmem>>, vector<1x128xf32>
    %cst_64 = arith.constant dense<0.000000e+00> : vector<1x128xf32>
    %144 = tpu.matmul %0, %141, %cst_64 {dimension_numbers = #tpu.dot_dimension_numbers<[1], [0], [0], [1], [0, 0, 1, 1], [], []>} : vector<1x64xf32>, vector<64x128xf32>, vector<1x128xf32> -> vector<1x128xf32>
    %145 = arith.mulf %141, %141 : vector<64x128xf32>
    %cst_65 = arith.constant dense<0.000000e+00> : vector<1x128xf32>
    %146 = tpu.matmul %0, %145, %cst_65 {dimension_numbers = #tpu.dot_dimension_numbers<[1], [0], [0], [1], [0, 0, 1, 1], [], []>} : vector<1x64xf32>, vector<64x128xf32>, vector<1x128xf32> -> vector<1x128xf32>
    %cst_66 = arith.constant 1.562500e-02 : f32
    %147 = vector.broadcast %cst_66 : f32 to vector<1x128xf32>
    %148 = arith.mulf %144, %147 : vector<1x128xf32>
    %cst_67 = arith.constant 1.562500e-02 : f32
    %149 = vector.broadcast %cst_67 : f32 to vector<1x128xf32>
    %150 = arith.mulf %146, %149 : vector<1x128xf32>
    %151 = arith.mulf %148, %148 : vector<1x128xf32>
    %152 = arith.subf %150, %151 : vector<1x128xf32>
    %cst_68 = arith.constant 0.000000e+00 : f32
    %153 = vector.broadcast %cst_68 : f32 to vector<1x128xf32>
    %154 = arith.maximumf %152, %153 : vector<1x128xf32>
    %cst_69 = arith.constant 9.99999974E-6 : f32
    %155 = vector.broadcast %cst_69 : f32 to vector<1x128xf32>
    %156 = arith.addf %154, %155 : vector<1x128xf32>
    %157 = math.rsqrt %156 : vector<1x128xf32>
    %158 = arith.mulf %142, %157 : vector<1x128xf32>
    %159 = arith.mulf %148, %158 : vector<1x128xf32>
    %160 = arith.subf %143, %159 : vector<1x128xf32>
    %161 = vector.broadcast %158 : vector<1x128xf32> to vector<64x128xf32>
    %162 = arith.mulf %141, %161 : vector<64x128xf32>
    %163 = vector.broadcast %160 : vector<1x128xf32> to vector<64x128xf32>
    %164 = arith.addf %162, %163 : vector<64x128xf32>
    %165 = arith.negf %164 : vector<64x128xf32>
    %166 = math.exp %165 : vector<64x128xf32>
    %cst_70 = arith.constant 1.000000e+00 : f32
    %167 = vector.broadcast %cst_70 : f32 to vector<64x128xf32>
    %168 = arith.addf %167, %166 : vector<64x128xf32>
    %169 = arith.divf %167, %168 : vector<64x128xf32>
    %170 = vector.extract_strided_slice %85 {offsets = [0, 0], sizes = [64, 16], strides = [1, 1]} : vector<64x128xf32> to vector<64x16xf32>
    %c0_71 = arith.constant 0 : index
    %c0_72 = arith.constant 0 : index
    %c0_73 = arith.constant 0 : index
    %171 = vector.load %arg4[%c0_71, %c0_72, %c0_73] : memref<1x64x16xf32, #tpu.memory_space<vmem>>, vector<1x64x16xf32>
    %172 = vector.shape_cast %171 : vector<1x64x16xf32> to vector<64x16xf32>
    %173 = vector.shape_cast %170 : vector<64x16xf32> to vector<1x64x16xf32>
    tpu.vector_store %arg4[%c0_71, %c0_72, %c0_73], %173 {strides = array<i32>} : memref<1x64x16xf32, #tpu.memory_space<vmem>>, vector<1x64x16xf32>,
    %174 = vector.extract_strided_slice %169 {offsets = [0, 0], sizes = [64, 6], strides = [1, 1]} : vector<64x128xf32> to vector<64x6xf32>
    %c0_74 = arith.constant 0 : index
    %c0_75 = arith.constant 0 : index
    %c0_76 = arith.constant 0 : index
    %175 = vector.load %arg5[%c0_74, %c0_75, %c0_76] : memref<1x64x6xf32, #tpu.memory_space<vmem>>, vector<1x64x6xf32>
    %176 = vector.shape_cast %175 : vector<1x64x6xf32> to vector<64x6xf32>
    %177 = vector.shape_cast %174 : vector<64x6xf32> to vector<1x64x6xf32>
    tpu.vector_store %arg5[%c0_74, %c0_75, %c0_76], %177 {strides = array<i32>} : memref<1x64x6xf32, #tpu.memory_space<vmem>>, vector<1x64x6xf32>,
    return
  }
  func.func @transform_0(%arg0: i32) -> (i32, i32, i32) {
    %c0_i32 = arith.constant 0 : i32
    %c0_i32_0 = arith.constant 0 : i32
    %c0_i32_1 = arith.constant 0 : i32
    return %arg0, %c0_i32, %c0_i32_0 : i32, i32, i32
  }
  func.func @transform_1(%arg0: i32) -> (i32, i32) {
    %c0_i32 = arith.constant 0 : i32
    %c0_i32_0 = arith.constant 0 : i32
    %c0_i32_1 = arith.constant 0 : i32
    return %c0_i32, %c0_i32_0 : i32, i32
  }
  func.func @transform_2(%arg0: i32) -> (i32, i32) {
    %c0_i32 = arith.constant 0 : i32
    %c0_i32_0 = arith.constant 0 : i32
    %c0_i32_1 = arith.constant 0 : i32
    return %c0_i32, %c0_i32_0 : i32, i32
  }
  func.func @transform_3(%arg0: i32) -> (i32, i32, i32) {
    %c0_i32 = arith.constant 0 : i32
    %c0_i32_0 = arith.constant 0 : i32
    %c0_i32_1 = arith.constant 0 : i32
    return %arg0, %c0_i32, %c0_i32_0 : i32, i32, i32
  }
  func.func @transform_4(%arg0: i32) -> (i32, i32, i32) {
    %c0_i32 = arith.constant 0 : i32
    %c0_i32_0 = arith.constant 0 : i32
    %c0_i32_1 = arith.constant 0 : i32
    return %arg0, %c0_i32, %c0_i32_0 : i32, i32, i32
  }
}

</mosaic_0001>

<llo_original>
// kernel: autoencoder_forward.1
$region0: #{autoencoder_forward.1}
  #allocation0 [shape = 'u32[]', space=smem, size = 0x4, offset = 0x4, fixed_abs, tag = 'smem constant byte address 0x4 - core index']
  #allocation1 [shape = 'u32[72,128]{1,0:T(1,128)}', space=vmem, size = 0x9000, scoped, tag = 'internal scratch']
  %s0 = inlined_call_operand.vmem [shape: f32[4,64,8], index: 0, kind: input, shape index: {}]
  %s1 = inlined_call_operand.hbm [shape: f32[1416,384], index: 1, kind: input, shape index: {}]
  %s2 = inlined_call_operand.hbm [shape: f32[16,384], index: 2, kind: input, shape index: {}]
  %s3 = inlined_call_operand.vmem [shape: f32[4,64,16], index: 3, kind: output, shape index: {0}]
  %s4 = inlined_call_operand.vmem [shape: f32[4,64,6], index: 4, kind: output, shape index: {1}]
  %5 = xla_tuple %s3, %s4
  %s6 = sld [smem:[#allocation0]]
  $region61: #{autoencoder_forward.1} parent=0
    _
  %s8 = ssub.s32 1, %s6
  %s9 = scalar_select 0, %s8, %s6
  $region1: #{autoencoder_forward.1} parent=0
    #allocation2 [shape = 'u8[2174976]{0}', space=vmem, size = 0x213000, scoped, tag = 'input window, operand 1, single buffered']
    #allocation3 [shape = 's32[2]{0}', space=sflag, size = 0x8, scoped, tag = 'scoped memory for autoencoder_forward.1']
    #allocation4 [shape = 'u8[24576]{0}', space=vmem, size = 0x6000, scoped, tag = 'input window, operand 2, single buffered']
    #allocation5 [shape = 's32[1]{0}', space=sflag, size = 0x4, scoped, tag = 'scoped memory for autoencoder_forward.1']
    %10 = vsyncpa [#allocation3], 0
    %11 = vsyncpa [#allocation5], 0
    loop: start=0, step=1, limit=6
    $region2: #{autoencoder_forward.1} parent=1 // loop_pre_header
      _
    $region3: #{autoencoder_forward.1} parent=1 // loop_header
      %s13 = sphi 0, %s17
      %p14 = scmp.ge.s32.totalorder %s13, 6
      %s23 = sphi 0, %s25
      %s26 = sphi 0, %s23
      %s27 = sphi 0, %s26
      %s43 = sphi 0, %s27
      %s47 = sphi 0, %s47
      %s49 = sphi 0, %s47
      %s50 = sphi 0, %s49
      %s64 = sphi 0, %s50
      %s68 = sphi 0, %s68
      %s70 = sphi 0, %s68
      %s71 = sphi 0, %s70
      %s85 = sphi 0, %s71
      %s91 = sphi 0, %s93
      %s94 = sphi 0, %s91
      %s95 = sphi 0, %s94
      %s111 = sphi 0, %s95
      %s117 = sphi 0, %s119
      %s120 = sphi 0, %s117
      %s121 = sphi 0, %s120
      %s137 = sphi 0, %s121
    $region4: #{autoencoder_forward.1} parent=1 // loop_header_branch
      %16 = sbr.rel (%p14) target = $region8
    $region5: #{autoencoder_forward.1} parent=1 // loop_body
      %s18 = ssub.s32 %s13, 1
      %s19 = ssub.s32 %s13, 2
      %s20 = sadd.s32 %s13, 1
      %s21 = ssub.s32 %s13, %s20
      %p22 = scmp.eq.s32.totalorder %s21, 0
      %s24 = sadd.s32 %s23, 1
      %s25 = scalar_select %p22, %s23, %s24
      %p28 = pneg %p22
      %p29 = scmp.eq.s32.totalorder %s13, 3
      %p30 = por %p28, %p29
      %p31 = scmp.ne.s32.totalorder %s23, %s26
      %p32 = scmp.eq.s32.totalorder %s13, 0
      %p33 = por %p31, %p32
      %p34 = scmp.ne.s32.totalorder %s23, %s26
      %p35 = scmp.eq.s32.totalorder %s18, 3
      %p36 = por %p34, %p35
      %p37 = scmp.ne.s32.totalorder %s26, %s27
      %p38 = scmp.eq.s32.totalorder %s18, 0
      %p39 = por %p37, %p38
      %p40 = scmp.ne.s32.totalorder %s26, %s27
      %p41 = scmp.eq.s32.totalorder %s19, 3
      %p42 = por %p40, %p41
      %p44 = scmp.ne.s32.totalorder %s27, %s43
      %p45 = scmp.eq.s32.totalorder %s19, 0
      %p46 = por %p44, %p45
      %s48 = sadd.s32 %s47, 1
      %p51 = scmp.eq.s32.totalorder %s13, 3
      %p52 = scmp.ne.s32.totalorder %s47, %s49
      %p53 = scmp.eq.s32.totalorder %s13, 0
      %p54 = por %p52, %p53
      %p55 = scmp.ne.s32.totalorder %s47, %s49
      %p56 = scmp.eq.s32.totalorder %s18, 3
      %p57 = por %p55, %p56
      %p58 = scmp.ne.s32.totalorder %s49, %s50
      %p59 = scmp.eq.s32.totalorder %s18, 0
      %p60 = por %p58, %p59
      %p61 = scmp.ne.s32.totalorder %s49, %s50
      %p62 = scmp.eq.s32.totalorder %s19, 3
      %p63 = por %p61, %p62
      %p65 = scmp.ne.s32.totalorder %s50, %s64
      %p66 = scmp.eq.s32.totalorder %s19, 0
      %p67 = por %p65, %p66
      %s69 = sadd.s32 %s68, 1
      %p72 = scmp.eq.s32.totalorder %s13, 3
      %p73 = scmp.ne.s32.totalorder %s68, %s70
      %p74 = scmp.eq.s32.totalorder %s13, 0
      %p75 = por %p73, %p74
      %p76 = scmp.ne.s32.totalorder %s68, %s70
      %p77 = scmp.eq.s32.totalorder %s18, 3
      %p78 = por %p76, %p77
      %p79 = scmp.ne.s32.totalorder %s70, %s71
      %p80 = scmp.eq.s32.totalorder %s18, 0
      %p81 = por %p79, %p80
      %p82 = scmp.ne.s32.totalorder %s70, %s71
      %p83 = scmp.eq.s32.totalorder %s19, 3
      %p84 = por %p82, %p83
      %p86 = scmp.ne.s32.totalorder %s71, %s85
      %p87 = scmp.eq.s32.totalorder %s19, 0
      %p88 = por %p86, %p87
      %s89 = ssub.s32 %s13, %s20
      %p90 = scmp.eq.s32.totalorder %s89, 0
      %s92 = sadd.s32 %s91, 1
      %s93 = scalar_select %p90, %s91, %s92
      %p96 = pneg %p90
      %p97 = scmp.eq.s32.totalorder %s13, 3
      %p98 = por %p96, %p97
      %p99 = scmp.ne.s32.totalorder %s91, %s94
      %p100 = scmp.eq.s32.totalorder %s13, 0
      %p101 = por %p99, %p100
      %p102 = scmp.ne.s32.totalorder %s91, %s94
      %p103 = scmp.eq.s32.totalorder %s18, 3
      %p104 = por %p102, %p103
      %p105 = scmp.ne.s32.totalorder %s94, %s95
      %p106 = scmp.eq.s32.totalorder %s18, 0
      %p107 = por %p105, %p106
      %p108 = scmp.ne.s32.totalorder %s94, %s95
      %p109 = scmp.eq.s32.totalorder %s19, 3
      %p110 = por %p108, %p109
      %p112 = scmp.ne.s32.totalorder %s95, %s111
      %p113 = scmp.eq.s32.totalorder %s19, 0
      %p114 = por %p112, %p113
      %s115 = ssub.s32 %s13, %s20
      %p116 = scmp.eq.s32.totalorder %s115, 0
      %s118 = sadd.s32 %s117, 1
      %s119 = scalar_select %p116, %s117, %s118
      %p122 = pneg %p116
      %p123 = scmp.eq.s32.totalorder %s13, 3
      %p124 = por %p122, %p123
      %p125 = scmp.ne.s32.totalorder %s117, %s120
      %p126 = scmp.eq.s32.totalorder %s13, 0
      %p127 = por %p125, %p126
      %p128 = scmp.ne.s32.totalorder %s117, %s120
      %p129 = scmp.eq.s32.totalorder %s18, 3
      %p130 = por %p128, %p129
      %p131 = scmp.ne.s32.totalorder %s120, %s121
      %p132 = scmp.eq.s32.totalorder %s18, 0
      %p133 = por %p131, %p132
      %p134 = scmp.ne.s32.totalorder %s120, %s121
      %p135 = scmp.eq.s32.totalorder %s19, 3
      %p136 = por %p134, %p135
      %p138 = scmp.ne.s32.totalorder %s121, %s137
      %p139 = scmp.eq.s32.totalorder %s19, 0
      %p140 = por %p138, %p139
      %p141 = scmp.le.s32.totalorder 1, %s13
      %p142 = scmp.lt.s32.totalorder %s13, 5
      %p143 = pnand %p141, %p142
      %p144 = pneg %p143
      // Predicated region
      $region9: #{autoencoder_forward.1} parent=5 // pred_check
        _
      $region10: #{autoencoder_forward.1} parent=5 // pred_check_branch
        %146 = sbr.rel (%p143) target = $region12
      $region11: #{autoencoder_forward.1} parent=5 // pred_region
        %s147 = ssub.s32 %s13, 1
        // Predicated region
        $region13: #{autoencoder_forward.1} parent=11 // pred_check
          %p148 = pneg %p60
        $region14: #{autoencoder_forward.1} parent=11 // pred_check_branch
          %150 = sbr.rel (%p148) target = $region16
        $region15: #{autoencoder_forward.1} parent=11 // pred_region
          %152 = vsyncadd [#allocation3], 0
          %s153 = sshll.u32 %s1, 4
          %s154 = int_to_ptr.hbm [resolvable:$true] %s153
          %s155 = sshll.u32 [#allocation2], 4
          %s156 = int_to_ptr.vmem [resolvable:$true] %s155
          %161 = dma.hbm_to_vmem [thread:$0]  %s154, 67968, %s156, [#allocation3], 384, 384, 24
        $region16: #{autoencoder_forward.1} parent=11 // pred_fallthru
          _
        // Predicated region
        $region17: #{autoencoder_forward.1} parent=11 // pred_check
          %p162 = pneg %p81
        $region18: #{autoencoder_forward.1} parent=11 // pred_check_branch
          %164 = sbr.rel (%p162) target = $region20
        $region19: #{autoencoder_forward.1} parent=11 // pred_region
          %166 = vsyncadd [#allocation5], 0
          %s167 = sshll.u32 %s2, 4
          %s168 = int_to_ptr.hbm [resolvable:$true] %s167
          %s169 = sshll.u32 [#allocation4], 4
          %s170 = int_to_ptr.vmem [resolvable:$true] %s169
          %175 = dma.hbm_to_vmem [thread:$0]  %s168, 768, %s170, [#allocation5], 384, 384, 24
        $region20: #{autoencoder_forward.1} parent=11 // pred_fallthru
          _
      $region12: #{autoencoder_forward.1} parent=5 // pred_fallthru
        _
      %p176 = scmp.lt.s32.totalorder %s13, 4
      // Predicated region
      $region21: #{autoencoder_forward.1} parent=5 // pred_check
        %p177 = pneg %p176
      $region22: #{autoencoder_forward.1} parent=5 // pred_check_branch
        %179 = sbr.rel (%p177) target = $region24
      $region23: #{autoencoder_forward.1} parent=5 // pred_region
        // Predicated region
        $region25: #{autoencoder_forward.1} parent=23 // pred_check
          %p180 = pneg %p33
        $region26: #{autoencoder_forward.1} parent=23 // pred_check_branch
          %182 = sbr.rel (%p180) target = $region28
        $region27: #{autoencoder_forward.1} parent=23 // pred_region
          %p183 = scmp.lt.s32.totalorder %s13, 3
          %s184 = scalar_select %p183, %s13, 3
          %s185 = smul.addr %s184, 8
          %s186 = smul.addr %s185, 8
          %s187 = scalar_lea.vmem %s0, %s186
        $region28: #{autoencoder_forward.1} parent=23 // pred_fallthru
          _
      $region24: #{autoencoder_forward.1} parent=5 // pred_fallthru
        _
      %p188 = scmp.le.s32.totalorder 1, %s13
      %p189 = scmp.lt.s32.totalorder %s13, 5
      %p190 = pnand %p188, %p189
      %p191 = pneg %p190
      // Predicated region
      $region29: #{autoencoder_forward.1} parent=5 // pred_check
        _
      $region30: #{autoencoder_forward.1} parent=5 // pred_check_branch
        %193 = sbr.rel (%p190) target = $region32
      $region31: #{autoencoder_forward.1} parent=5 // pred_region
        %s194 = ssub.s32 %s13, 1
        // Predicated region
        $region33: #{autoencoder_forward.1} parent=31 // pred_check
          %p195 = pneg %p60
        $region34: #{autoencoder_forward.1} parent=31 // pred_check_branch
          %197 = sbr.rel (%p195) target = $region36
        $region35: #{autoencoder_forward.1} parent=31 // pred_region
          %199 = dma.done [#allocation3], 67968
        $region36: #{autoencoder_forward.1} parent=31 // pred_fallthru
          _
        // Predicated region
        $region37: #{autoencoder_forward.1} parent=31 // pred_check
          %p200 = pneg %p81
        $region38: #{autoencoder_forward.1} parent=31 // pred_check_branch
          %202 = sbr.rel (%p200) target = $region40
        $region39: #{autoencoder_forward.1} parent=31 // pred_region
          %204 = dma.done [#allocation5], 768
        $region40: #{autoencoder_forward.1} parent=31 // pred_fallthru
          _
        %p205 = scmp.lt.s32.totalorder %s18, 3
        %s206 = scalar_select %p205, %s18, 3
        %s207 = smul.addr %s206, 8
        %s208 = smul.addr %s207, 8
        %s209 = scalar_lea.vmem %s0, %s208
        %p210 = pneg %p39
        %p211 = pneg %p36
        %p212 = pneg %p60
        %p213 = pneg %p57
        %p214 = pneg %p81
        %p215 = pneg %p78
        %p216 = pneg %p107
        %p217 = pneg %p104
        %p218 = scmp.lt.s32.totalorder %s18, 3
        %s219 = scalar_select %p218, %s18, 3
        %s220 = smul.addr %s219, 8
        %s221 = smul.addr %s220, 8
        %s222 = scalar_lea.vmem %s3, %s221
        %p223 = pneg %p133
        %p224 = pneg %p130
        %p225 = scmp.lt.s32.totalorder %s18, 3
        %s226 = scalar_select %p225, %s18, 3
        %s227 = smul.addr %s226, 8
        %s228 = smul.addr %s227, 8
        %s229 = scalar_lea.vmem %s4, %s228
        %p230 = scmp.lt.s32.totalorder %s18, 3
        %s231 = scalar_select %p230, %s18, 3
        %s232 = smul.addr %s231, 8
        %s233 = smul.addr %s232, 8
        %s234 = scalar_lea.vmem %s0, %s233
        %p235 = scmp.lt.s32.totalorder %s18, 3
        %s236 = scalar_select %p235, %s18, 3
        %s237 = smul.addr %s236, 8
        %s238 = smul.addr %s237, 8
        %s239 = scalar_lea.vmem %s3, %s238
        %p240 = scmp.lt.s32.totalorder %s18, 3
        %s241 = scalar_select %p240, %s18, 3
        %s242 = smul.addr %s241, 8
        %s243 = smul.addr %s242, 8
        %s244 = scalar_lea.vmem %s4, %s243
        %v245 = vld [vmem:[%s234] sm:$0xff]
        %v246 = vld [vmem:[%s234 + $0x8] sm:$0xff]
        %v247 = vld [vmem:[%s234 + $0x10] sm:$0xff]
        %v248 = vld [vmem:[%s234 + $0x18] sm:$0xff]
        %v249 = vld [vmem:[%s234 + $0x20] sm:$0xff]
        %v250 = vld [vmem:[%s234 + $0x28] sm:$0xff]
        %v251 = vld [vmem:[%s234 + $0x30] sm:$0xff]
        %v252 = vld [vmem:[%s234 + $0x38] sm:$0xff]
        %v253 = vld [vmem:[#allocation2] sm:$0xff]
        %vm254 = vcmask 64512
        %v256 = vsel %vm254, %v245, 0
        %v259 = vsel %vm254, %v246, 0
        %v262 = vsel %vm254, %v247, 0
        %v265 = vsel %vm254, %v248, 0
        %v268 = vsel %vm254, %v249, 0
        %v271 = vsel %vm254, %v250, 0
        %v274 = vsel %vm254, %v251, 0
        %v277 = vsel %vm254, %v252, 0
        %279 = vmatpush.msra.mxu0 0.0
        %280 = vmatpush.msra.mxu0 0.0
        %281 = vmatpush.msra.mxu0 0.0
        %282 = vmatpush.msra.mxu0 0.0
        %283 = vmatpush.msra.mxu0 0.0
        %284 = vmatpush.msra.mxu0 0.0
        %285 = vmatpush.msra.mxu0 0.0
        %286 = vmatpush.msra.mxu0 0.0
        %287 = vmatpush.msra.mxu0 0.0
        %288 = vmatpush.msra.mxu0 0.0
        %289 = vmatpush.msra.mxu0 0.0
        %290 = vmatpush.msra.mxu0 0.0
        %291 = vmatpush.msra.mxu0 0.0
        %292 = vmatpush.msra.mxu0 0.0
        %293 = vmatpush.msra.mxu0 0.0
        %294 = vmatpush.msra.mxu0 %v253
        %295 = vmatmul.f32.gmra.mxu0 %v256
        %v296 = vpop.f32.mrf.mxu0
        %v297 = vadd.f32 0.0, %v296
        %298 = vmatmul.f32.gmra.mxu0 %v259
        %v299 = vpop.f32.mrf.mxu0
        %v300 = vadd.f32 0.0, %v299
        %301 = vmatmul.f32.gmra.mxu0 %v262
        %v302 = vpop.f32.mrf.mxu0
        %v303 = vadd.f32 0.0, %v302
        %304 = vmatmul.f32.gmra.mxu0 %v265
        %v305 = vpop.f32.mrf.mxu0
        %v306 = vadd.f32 0.0, %v305
        %307 = vmatmul.f32.gmra.mxu0 %v268
        %v308 = vpop.f32.mrf.mxu0
        %v309 = vadd.f32 0.0, %v308
        %310 = vmatmul.f32.gmra.mxu0 %v271
        %v311 = vpop.f32.mrf.mxu0
        %v312 = vadd.f32 0.0, %v311
        %313 = vmatmul.f32.gmra.mxu0 %v274
        %v314 = vpop.f32.mrf.mxu0
        %v315 = vadd.f32 0.0, %v314
        %316 = vmatmul.f32.gmra.mxu0 %v277
        %v317 = vpop.f32.mrf.mxu0
        %v318 = vadd.f32 0.0, %v317
        %319 = vdwg.mxu0
        %v320 = vld [vmem:[#allocation4 + $0x1] ss:$0 sm:$0xff]
        %v321 = vld [vmem:[#allocation4 + $0x2] ss:$0 sm:$0xff]
        %vm322 = vcmask 523264
        %v324 = vsel %vm322, 1.0, 0
        %326 = vmatpush.msra.mxu0 0.0
        %327 = vmatpush.msra.mxu0 0.0
        %328 = vmatpush.msra.mxu0 0.0
        %329 = vmatpush.msra.mxu0 0.0
        %330 = vmatpush.msra.mxu0 0.0
        %331 = vmatpush.msra.mxu0 0.0
        %332 = vmatpush.msra.mxu0 0.0
        %333 = vmatpush.msra.mxu0 0.0
        %334 = vmatpush.msra.mxu0 %v318
        %335 = vmatpush.msra.mxu0 %v315
        %336 = vmatpush.msra.mxu0 %v312
        %337 = vmatpush.msra.mxu0 %v309
        %338 = vmatpush.msra.mxu0 %v306
        %339 = vmatpush.msra.mxu0 %v303
        %340 = vmatpush.msra.mxu0 %v300
        %341 = vmatpush.msra.mxu0 %v297
        %342 = vmatmul.f32.gmra.mxu0 %v324
        %v343 = vpop.f32.mrf.mxu0
        %v344 = vadd.f32 0.0, %v343
        %345 = vdwg.mxu0
        %v346 = vmul.f32 %v297, %v297
        %v347 = vmul.f32 %v300, %v300
        %v348 = vmul.f32 %v303, %v303
        %v349 = vmul.f32 %v306, %v306
        %v350 = vmul.f32 %v309, %v309
        %v351 = vmul.f32 %v312, %v312
        %v352 = vmul.f32 %v315, %v315
        %v353 = vmul.f32 %v318, %v318
        %354 = vmatpush.msra.mxu0 0.0
        %355 = vmatpush.msra.mxu0 0.0
        %356 = vmatpush.msra.mxu0 0.0
        %357 = vmatpush.msra.mxu0 0.0
        %358 = vmatpush.msra.mxu0 0.0
        %359 = vmatpush.msra.mxu0 0.0
        %360 = vmatpush.msra.mxu0 0.0
        %361 = vmatpush.msra.mxu0 0.0
        %362 = vmatpush.msra.mxu0 %v353
        %363 = vmatpush.msra.mxu0 %v352
        %364 = vmatpush.msra.mxu0 %v351
        %365 = vmatpush.msra.mxu0 %v350
        %366 = vmatpush.msra.mxu0 %v349
        %367 = vmatpush.msra.mxu0 %v348
        %368 = vmatpush.msra.mxu0 %v347
        %369 = vmatpush.msra.mxu0 %v346
        %370 = vmatmul.f32.gmra.mxu0 %v324
        %v371 = vpop.f32.mrf.mxu0
        %v372 = vadd.f32 0.0, %v371
        %373 = vdwg.mxu0
        %v374 = vmul.f32 %v344, 0.015625
        %v375 = vmul.f32 %v372, 0.015625
        %v376 = vmul.f32 %v374, %v374
        %v377 = vsub.f32 %v375, %v376
        %v378 = vmax.f32 %v377, 0.0
        %v379 = vadd.f32 %v378, 1e-05
        %v380 = vrsqrt.pop %v379
        %v381 = vmul.f32 %v380, %v379
        %v382 = vmul.f32 %v381, %v380
        %v383 = vmul.f32 0.5, %v382
        %v384 = vsub.f32 1.5, %v383
        %v385 = vmul.f32 %v380, %v384
        %vm386 = vweird.f32 %v379
        %vm387 = vweird.f32 %v380
        %vm388 = vmor %vm386, %vm387
        %v389 = vsel %vm388, %v380, %v385
        %v390 = vmul.f32 %v320, %v389
        %v391 = vmul.f32 %v374, %v390
        %v392 = vsub.f32 %v321, %v391
        %v393 = vperm.slane %v390, 0
        %v394 = vmul.f32 %v297, %v393
        %v395 = vmul.f32 %v300, %v393
        %v396 = vmul.f32 %v303, %v393
        %v397 = vmul.f32 %v306, %v393
        %v398 = vmul.f32 %v309, %v393
        %v399 = vmul.f32 %v312, %v393
        %v400 = vmul.f32 %v315, %v393
        %v401 = vmul.f32 %v318, %v393
        %v402 = vperm.slane %v392, 0
        %v403 = vadd.f32 %v394, %v402
        %v404 = vadd.f32 %v395, %v402
        %v405 = vadd.f32 %v396, %v402
        %v406 = vadd.f32 %v397, %v402
        %v407 = vadd.f32 %v398, %v402
        %v408 = vadd.f32 %v399, %v402
        %v409 = vadd.f32 %v400, %v402
        %v410 = vadd.f32 %v401, %v402
        %v411 = vtanh.pop %v403
        %v412 = vtanh.pop %v404
        %v413 = vtanh.pop %v405
        %v414 = vtanh.pop %v406
        %v415 = vtanh.pop %v407
        %v416 = vtanh.pop %v408
        %v417 = vtanh.pop %v409
        %v418 = vtanh.pop %v410
        %v419 = vld [vmem:[#allocation2 + $0x18] sm:$0xff]
        %v420 = vld [vmem:[#allocation2 + $0x30] sm:$0xff]
        %v421 = vld [vmem:[#allocation2 + $0x48] sm:$0xff]
        %v422 = vld [vmem:[#allocation2 + $0x60] sm:$0xff]
        %v423 = vld [vmem:[#allocation2 + $0x78] sm:$0xff]
        %v424 = vld [vmem:[#allocation2 + $0x90] sm:$0xff]
        %v425 = vld [vmem:[#allocation2 + $0xa8] sm:$0xff]
        %v426 = vld [vmem:[#allocation2 + $0xc0] sm:$0xff]
        %v427 = vld [vmem:[#allocation2 + $0xd8] sm:$0xff]
        %v428 = vld [vmem:[#allocation2 + $0xf0] sm:$0xff]
        %v429 = vld [vmem:[#allocation2 + $0x108] sm:$0xff]
        %v430 = vld [vmem:[#allocation2 + $0x120] sm:$0xff]
        %v431 = vld [vmem:[#allocation2 + $0x138] sm:$0xff]
        %v432 = vld [vmem:[#allocation2 + $0x150] sm:$0xff]
        %v433 = vld [vmem:[#allocation2 + $0x168] sm:$0xff]
        %v434 = vld [vmem:[#allocation2 + $0x180] sm:$0xff]
        %435 = vmatpush.msra.mxu0 %v434
        %436 = vmatpush.msra.mxu0 %v433
        %437 = vmatpush.msra.mxu0 %v432
        %438 = vmatpush.msra.mxu0 %v431
        %439 = vmatpush.msra.mxu0 %v430
        %440 = vmatpush.msra.mxu0 %v429
        %441 = vmatpush.msra.mxu0 %v428
        %442 = vmatpush.msra.mxu0 %v427
        %443 = vmatpush.msra.mxu0 %v426
        %444 = vmatpush.msra.mxu0 %v425
        %445 = vmatpush.msra.mxu0 %v424
        %446 = vmatpush.msra.mxu0 %v423
        %447 = vmatpush.msra.mxu0 %v422
        %448 = vmatpush.msra.mxu0 %v421
        %449 = vmatpush.msra.mxu0 %v420
        %450 = vmatpush.msra.mxu0 %v419
        %451 = vmatmul.f32.gmra.mxu0 %v411
        %v452 = vpop.f32.mrf.mxu0
        %v453 = vadd.f32 0.0, %v452
        %454 = vmatmul.f32.gmra.mxu0 %v412
        %v455 = vpop.f32.mrf.mxu0
        %v456 = vadd.f32 0.0, %v455
        %457 = vmatmul.f32.gmra.mxu0 %v413
        %v458 = vpop.f32.mrf.mxu0
        %v459 = vadd.f32 0.0, %v458
        %460 = vmatmul.f32.gmra.mxu0 %v414
        %v461 = vpop.f32.mrf.mxu0
        %v462 = vadd.f32 0.0, %v461
        %463 = vmatmul.f32.gmra.mxu0 %v415
        %v464 = vpop.f32.mrf.mxu0
        %v465 = vadd.f32 0.0, %v464
        %466 = vmatmul.f32.gmra.mxu0 %v416
        %v467 = vpop.f32.mrf.mxu0
        %v468 = vadd.f32 0.0, %v467
        %469 = vmatmul.f32.gmra.mxu0 %v417
        %v470 = vpop.f32.mrf.mxu0
        %v471 = vadd.f32 0.0, %v470
        %472 = vmatmul.f32.gmra.mxu0 %v418
        %v473 = vpop.f32.mrf.mxu0
        %v474 = vadd.f32 0.0, %v473
        %475 = vdwg.mxu0
        %v476 = vld [vmem:[#allocation4 + $0x3] ss:$0 sm:$0xff]
        %v477 = vld [vmem:[#allocation4 + $0x4] ss:$0 sm:$0xff]
        %478 = vmatpush.msra.mxu0 0.0
        %479 = vmatpush.msra.mxu0 0.0
        %480 = vmatpush.msra.mxu0 0.0
        %481 = vmatpush.msra.mxu0 0.0
        %482 = vmatpush.msra.mxu0 0.0
        %483 = vmatpush.msra.mxu0 0.0
        %484 = vmatpush.msra.mxu0 0.0
        %485 = vmatpush.msra.mxu0 0.0
        %486 = vmatpush.msra.mxu0 %v474
        %487 = vmatpush.msra.mxu0 %v471
        %488 = vmatpush.msra.mxu0 %v468
        %489 = vmatpush.msra.mxu0 %v465
        %490 = vmatpush.msra.mxu0 %v462
        %491 = vmatpush.msra.mxu0 %v459
        %492 = vmatpush.msra.mxu0 %v456
        %493 = vmatpush.msra.mxu0 %v453
        %494 = vmatmul.f32.gmra.mxu0 %v324
        %v495 = vpop.f32.mrf.mxu0
        %v496 = vadd.f32 0.0, %v495
        %497 = vdwg.mxu0
        %v498 = vmul.f32 %v453, %v453
        %v499 = vmul.f32 %v456, %v456
        %v500 = vmul.f32 %v459, %v459
        %v501 = vmul.f32 %v462, %v462
        %v502 = vmul.f32 %v465, %v465
        %v503 = vmul.f32 %v468, %v468
        %v504 = vmul.f32 %v471, %v471
        %v505 = vmul.f32 %v474, %v474
        %506 = vmatpush.msra.mxu0 0.0
        %507 = vmatpush.msra.mxu0 0.0
        %508 = vmatpush.msra.mxu0 0.0
        %509 = vmatpush.msra.mxu0 0.0
        %510 = vmatpush.msra.mxu0 0.0
        %511 = vmatpush.msra.mxu0 0.0
        %512 = vmatpush.msra.mxu0 0.0
        %513 = vmatpush.msra.mxu0 0.0
        %514 = vmatpush.msra.mxu0 %v505
        %515 = vmatpush.msra.mxu0 %v504
        %516 = vmatpush.msra.mxu0 %v503
        %517 = vmatpush.msra.mxu0 %v502
        %518 = vmatpush.msra.mxu0 %v501
        %519 = vmatpush.msra.mxu0 %v500
        %520 = vmatpush.msra.mxu0 %v499
        %521 = vmatpush.msra.mxu0 %v498
        %522 = vmatmul.f32.gmra.mxu0 %v324
        %v523 = vpop.f32.mrf.mxu0
        %v524 = vadd.f32 0.0, %v523
        %525 = vdwg.mxu0
        %v526 = vmul.f32 %v496, 0.015625
        %v527 = vmul.f32 %v524, 0.015625
        %v528 = vmul.f32 %v526, %v526
        %v529 = vsub.f32 %v527, %v528
        %v530 = vmax.f32 %v529, 0.0
        %v531 = vadd.f32 %v530, 1e-05
        %v532 = vrsqrt.pop %v531
        %v533 = vmul.f32 %v532, %v531
        %v534 = vmul.f32 %v533, %v532
        %v535 = vmul.f32 0.5, %v534
        %v536 = vsub.f32 1.5, %v535
        %v537 = vmul.f32 %v532, %v536
        %vm538 = vweird.f32 %v531
        %vm539 = vweird.f32 %v532
        %vm540 = vmor %vm538, %vm539
        %v541 = vsel %vm540, %v532, %v537
        %v542 = vmul.f32 %v476, %v541
        %v543 = vmul.f32 %v526, %v542
        %v544 = vsub.f32 %v477, %v543
        %v545 = vperm.slane %v542, 0
        %v546 = vmul.f32 %v453, %v545
        %v547 = vmul.f32 %v456, %v545
        %v548 = vmul.f32 %v459, %v545
        %v549 = vmul.f32 %v462, %v545
        %v550 = vmul.f32 %v465, %v545
        %v551 = vmul.f32 %v468, %v545
        %v552 = vmul.f32 %v471, %v545
        %v553 = vmul.f32 %v474, %v545
        %v554 = vperm.slane %v544, 0
        %v555 = vadd.f32 %v546, %v554
        %v556 = vadd.f32 %v547, %v554
        %v557 = vadd.f32 %v548, %v554
        %v558 = vadd.f32 %v549, %v554
        %v559 = vadd.f32 %v550, %v554
        %v560 = vadd.f32 %v551, %v554
        %v561 = vadd.f32 %v552, %v554
        %v562 = vadd.f32 %v553, %v554
        %v563 = vtanh.pop %v555
        %v564 = vtanh.pop %v556
        %v565 = vtanh.pop %v557
        %v566 = vtanh.pop %v558
        %v567 = vtanh.pop %v559
        %v568 = vtanh.pop %v560
        %v569 = vtanh.pop %v561
        %v570 = vtanh.pop %v562
        %v571 = vld [vmem:[#allocation2 + $0x198] sm:$0xff]
        %v572 = vld [vmem:[#allocation2 + $0x1a0] sm:$0xff]
        %v573 = vld [vmem:[#allocation2 + $0x1a8] sm:$0xff]
        %v574 = vld [vmem:[#allocation2 + $0x1b0] sm:$0xff]
        %v575 = vld [vmem:[#allocation2 + $0x1b8] sm:$0xff]
        %v576 = vld [vmem:[#allocation2 + $0x1c0] sm:$0xff]
        %v577 = vld [vmem:[#allocation2 + $0x1c8] sm:$0xff]
        %v578 = vld [vmem:[#allocation2 + $0x1d0] sm:$0xff]
        %v579 = vld [vmem:[#allocation2 + $0x1d8] sm:$0xff]
        %v580 = vld [vmem:[#allocation2 + $0x1e0] sm:$0xff]
        %v581 = vld [vmem:[#allocation2 + $0x1e8] sm:$0xff]
        %v582 = vld [vmem:[#allocation2 + $0x1f0] sm:$0xff]
        %v583 = vld [vmem:[#allocation2 + $0x1f8] sm:$0xff]
        %v584 = vld [vmem:[#allocation2 + $0x200] sm:$0xff]
        %v585 = vld [vmem:[#allocation2 + $0x208] sm:$0xff]
        %v586 = vld [vmem:[#allocation2 + $0x210] sm:$0xff]
        %v587 = vld [vmem:[#allocation2 + $0x218] sm:$0xff]
        %v588 = vld [vmem:[#allocation2 + $0x220] sm:$0xff]
        %v589 = vld [vmem:[#allocation2 + $0x228] sm:$0xff]
        %v590 = vld [vmem:[#allocation2 + $0x230] sm:$0xff]
        %v591 = vld [vmem:[#allocation2 + $0x238] sm:$0xff]
        %v592 = vld [vmem:[#allocation2 + $0x240] sm:$0xff]
        %v593 = vld [vmem:[#allocation2 + $0x248] sm:$0xff]
        %v594 = vld [vmem:[#allocation2 + $0x250] sm:$0xff]
        %v595 = vld [vmem:[#allocation2 + $0x258] sm:$0xff]
        %v596 = vld [vmem:[#allocation2 + $0x260] sm:$0xff]
        %v597 = vld [vmem:[#allocation2 + $0x268] sm:$0xff]
        %v598 = vld [vmem:[#allocation2 + $0x270] sm:$0xff]
        %v599 = vld [vmem:[#allocation2 + $0x278] sm:$0xff]
        %v600 = vld [vmem:[#allocation2 + $0x280] sm:$0xff]
        %v601 = vld [vmem:[#allocation2 + $0x288] sm:$0xff]
        %v602 = vld [vmem:[#allocation2 + $0x290] sm:$0xff]
        %v603 = vld [vmem:[#allocation2 + $0x298] sm:$0xff]
        %v604 = vld [vmem:[#allocation2 + $0x2a0] sm:$0xff]
        %v605 = vld [vmem:[#allocation2 + $0x2a8] sm:$0xff]
        %v606 = vld [vmem:[#allocation2 + $0x2b0] sm:$0xff]
        %v607 = vld [vmem:[#allocation2 + $0x2b8] sm:$0xff]
        %v608 = vld [vmem:[#allocation2 + $0x2c0] sm:$0xff]
        %v609 = vld [vmem:[#allocation2 + $0x2c8] sm:$0xff]
        %v610 = vld [vmem:[#allocation2 + $0x2d0] sm:$0xff]
        %v611 = vld [vmem:[#allocation2 + $0x2d8] sm:$0xff]
        %v612 = vld [vmem:[#allocation2 + $0x2e0] sm:$0xff]
        %v613 = vld [vmem:[#allocation2 + $0x2e8] sm:$0xff]
        %v614 = vld [vmem:[#allocation2 + $0x2f0] sm:$0xff]
        %v615 = vld [vmem:[#allocation2 + $0x2f8] sm:$0xff]
        %v616 = vld [vmem:[#allocation2 + $0x300] sm:$0xff]
        %v617 = vld [vmem:[#allocation2 + $0x308] sm:$0xff]
        %v618 = vld [vmem:[#allocation2 + $0x310] sm:$0xff]
        %619 = vmatpush.msra.mxu0 %v616
        %620 = vmatpush.msra.mxu0 %v613
        %621 = vmatpush.msra.mxu0 %v610
        %622 = vmatpush.msra.mxu0 %v607
        %623 = vmatpush.msra.mxu0 %v604
        %624 = vmatpush.msra.mxu0 %v601
        %625 = vmatpush.msra.mxu0 %v598
        %626 = vmatpush.msra.mxu0 %v595
        %627 = vmatpush.msra.mxu0 %v592
        %628 = vmatpush.msra.mxu0 %v589
        %629 = vmatpush.msra.mxu0 %v586
        %630 = vmatpush.msra.mxu0 %v583
        %631 = vmatpush.msra.mxu0 %v580
        %632 = vmatpush.msra.mxu0 %v577
        %633 = vmatpush.msra.mxu0 %v574
        %634 = vmatpush.msra.mxu0 %v571
        %635 = vmatmul.f32.gmra.mxu0 %v563
        %v636 = vpop.f32.mrf.mxu0
        %v637 = vadd.f32 0.0, %v636
        %638 = vmatmul.f32.gmra.mxu0 %v564
        %v639 = vpop.f32.mrf.mxu0
        %v640 = vadd.f32 0.0, %v639
        %641 = vmatmul.f32.gmra.mxu0 %v565
        %v642 = vpop.f32.mrf.mxu0
        %v643 = vadd.f32 0.0, %v642
        %644 = vmatmul.f32.gmra.mxu0 %v566
        %v645 = vpop.f32.mrf.mxu0
        %v646 = vadd.f32 0.0, %v645
        %647 = vmatmul.f32.gmra.mxu0 %v567
        %v648 = vpop.f32.mrf.mxu0
        %v649 = vadd.f32 0.0, %v648
        %650 = vmatmul.f32.gmra.mxu0 %v568
        %v651 = vpop.f32.mrf.mxu0
        %v652 = vadd.f32 0.0, %v651
        %653 = vmatmul.f32.gmra.mxu0 %v569
        %v654 = vpop.f32.mrf.mxu0
        %v655 = vadd.f32 0.0, %v654
        %656 = vmatmul.f32.gmra.mxu0 %v570
        %v657 = vpop.f32.mrf.mxu0
        %v658 = vadd.f32 0.0, %v657
        %659 = vdwg.mxu0
        %660 = vmatpush.msra.mxu0 %v617
        %661 = vmatpush.msra.mxu0 %v614
        %662 = vmatpush.msra.mxu0 %v611
        %663 = vmatpush.msra.mxu0 %v608
        %664 = vmatpush.msra.mxu0 %v605
        %665 = vmatpush.msra.mxu0 %v602
        %666 = vmatpush.msra.mxu0 %v599
        %667 = vmatpush.msra.mxu0 %v596
        %668 = vmatpush.msra.mxu0 %v593
        %669 = vmatpush.msra.mxu0 %v590
        %670 = vmatpush.msra.mxu0 %v587
        %671 = vmatpush.msra.mxu0 %v584
        %672 = vmatpush.msra.mxu0 %v581
        %673 = vmatpush.msra.mxu0 %v578
        %674 = vmatpush.msra.mxu0 %v575
        %675 = vmatpush.msra.mxu0 %v572
        %676 = vmatmul.f32.gmra.mxu0 %v563
        %v677 = vpop.f32.mrf.mxu0
        %v678 = vadd.f32 0.0, %v677
        %679 = vmatmul.f32.gmra.mxu0 %v564
        %v680 = vpop.f32.mrf.mxu0
        %v681 = vadd.f32 0.0, %v680
        %682 = vmatmul.f32.gmra.mxu0 %v565
        %v683 = vpop.f32.mrf.mxu0
        %v684 = vadd.f32 0.0, %v683
        %685 = vmatmul.f32.gmra.mxu0 %v566
        %v686 = vpop.f32.mrf.mxu0
        %v687 = vadd.f32 0.0, %v686
        %688 = vmatmul.f32.gmra.mxu0 %v567
        %v689 = vpop.f32.mrf.mxu0
        %v690 = vadd.f32 0.0, %v689
        %691 = vmatmul.f32.gmra.mxu0 %v568
        %v692 = vpop.f32.mrf.mxu0
        %v693 = vadd.f32 0.0, %v692
        %694 = vmatmul.f32.gmra.mxu0 %v569
        %v695 = vpop.f32.mrf.mxu0
        %v696 = vadd.f32 0.0, %v695
        %697 = vmatmul.f32.gmra.mxu0 %v570
        %v698 = vpop.f32.mrf.mxu0
        %v699 = vadd.f32 0.0, %v698
        %700 = vdwg.mxu0
        %701 = vmatpush.msra.mxu0 %v618
        %702 = vmatpush.msra.mxu0 %v615
        %703 = vmatpush.msra.mxu0 %v612
        %704 = vmatpush.msra.mxu0 %v609
        %705 = vmatpush.msra.mxu0 %v606
        %706 = vmatpush.msra.mxu0 %v603
        %707 = vmatpush.msra.mxu0 %v600
        %708 = vmatpush.msra.mxu0 %v597
        %709 = vmatpush.msra.mxu0 %v594
        %710 = vmatpush.msra.mxu0 %v591
        %711 = vmatpush.msra.mxu0 %v588
        %712 = vmatpush.msra.mxu0 %v585
        %713 = vmatpush.msra.mxu0 %v582
        %714 = vmatpush.msra.mxu0 %v579
        %715 = vmatpush.msra.mxu0 %v576
        %716 = vmatpush.msra.mxu0 %v573
        %717 = vmatmul.f32.gmra.mxu0 %v563
        %v718 = vpop.f32.mrf.mxu0
        %v719 = vadd.f32 0.0, %v718
        %720 = vmatmul.f32.gmra.mxu0 %v564
        %v721 = vpop.f32.mrf.mxu0
        %v722 = vadd.f32 0.0, %v721
        %723 = vmatmul.f32.gmra.mxu0 %v565
        %v724 = vpop.f32.mrf.mxu0
        %v725 = vadd.f32 0.0, %v724
        %726 = vmatmul.f32.gmra.mxu0 %v566
        %v727 = vpop.f32.mrf.mxu0
        %v728 = vadd.f32 0.0, %v727
        %729 = vmatmul.f32.gmra.mxu0 %v567
        %v730 = vpop.f32.mrf.mxu0
        %v731 = vadd.f32 0.0, %v730
        %732 = vmatmul.f32.gmra.mxu0 %v568
        %v733 = vpop.f32.mrf.mxu0
        %v734 = vadd.f32 0.0, %v733
        %735 = vmatmul.f32.gmra.mxu0 %v569
        %v736 = vpop.f32.mrf.mxu0
        %v737 = vadd.f32 0.0, %v736
        %738 = vmatmul.f32.gmra.mxu0 %v570
        %v739 = vpop.f32.mrf.mxu0
        %v740 = vadd.f32 0.0, %v739
        %741 = vdwg.mxu0
        %s742 = scalar_lea.vmem [#allocation4], 5
        %v743 = vld [vmem:[%s742] ss:$8 sm:$0x7]
        %s744 = scalar_lea.vmem [#allocation4], 6
        %v745 = vld [vmem:[%s744] ss:$8 sm:$0x7]
        %746 = vmatpush.msra.mxu0 0.0
        %747 = vmatpush.msra.mxu0 0.0
        %748 = vmatpush.msra.mxu0 0.0
        %749 = vmatpush.msra.mxu0 0.0
        %750 = vmatpush.msra.mxu0 0.0
        %751 = vmatpush.msra.mxu0 0.0
        %752 = vmatpush.msra.mxu0 0.0
        %753 = vmatpush.msra.mxu0 0.0
        %754 = vmatpush.msra.mxu0 %v658
        %755 = vmatpush.msra.mxu0 %v655
        %756 = vmatpush.msra.mxu0 %v652
        %757 = vmatpush.msra.mxu0 %v649
        %758 = vmatpush.msra.mxu0 %v646
        %759 = vmatpush.msra.mxu0 %v643
        %760 = vmatpush.msra.mxu0 %v640
        %761 = vmatpush.msra.mxu0 %v637
        %762 = vmatmul.f32.gmra.mxu0 %v324
        %v763 = vpop.f32.mrf.mxu0
        %v764 = vadd.f32 0.0, %v763
        %765 = vdwg.mxu0
        %766 = vmatpush.msra.mxu0 0.0
        %767 = vmatpush.msra.mxu0 0.0
        %768 = vmatpush.msra.mxu0 0.0
        %769 = vmatpush.msra.mxu0 0.0
        %770 = vmatpush.msra.mxu0 0.0
        %771 = vmatpush.msra.mxu0 0.0
        %772 = vmatpush.msra.mxu0 0.0
        %773 = vmatpush.msra.mxu0 0.0
        %774 = vmatpush.msra.mxu0 %v699
        %775 = vmatpush.msra.mxu0 %v696
        %776 = vmatpush.msra.mxu0 %v693
        %777 = vmatpush.msra.mxu0 %v690
        %778 = vmatpush.msra.mxu0 %v687
        %779 = vmatpush.msra.mxu0 %v684
        %780 = vmatpush.msra.mxu0 %v681
        %781 = vmatpush.msra.mxu0 %v678
        %782 = vmatmul.f32.gmra.mxu0 %v324
        %v783 = vpop.f32.mrf.mxu0
        %v784 = vadd.f32 0.0, %v783
        %785 = vdwg.mxu0
        %786 = vmatpush.msra.mxu0 0.0
        %787 = vmatpush.msra.mxu0 0.0
        %788 = vmatpush.msra.mxu0 0.0
        %789 = vmatpush.msra.mxu0 0.0
        %790 = vmatpush.msra.mxu0 0.0
        %791 = vmatpush.msra.mxu0 0.0
        %792 = vmatpush.msra.mxu0 0.0
        %793 = vmatpush.msra.mxu0 0.0
        %794 = vmatpush.msra.mxu0 %v740
        %795 = vmatpush.msra.mxu0 %v737
        %796 = vmatpush.msra.mxu0 %v734
        %797 = vmatpush.msra.mxu0 %v731
        %798 = vmatpush.msra.mxu0 %v728
        %799 = vmatpush.msra.mxu0 %v725
        %800 = vmatpush.msra.mxu0 %v722
        %801 = vmatpush.msra.mxu0 %v719
        %802 = vmatmul.f32.gmra.mxu0 %v324
        %v803 = vpop.f32.mrf.mxu0
        %v804 = vadd.f32 0.0, %v803
        %805 = vdwg.mxu0
        %v806 = vmul.f32 %v637, %v637
        %v807 = vmul.f32 %v678, %v678
        %v808 = vmul.f32 %v719, %v719
        %v809 = vmul.f32 %v640, %v640
        %v810 = vmul.f32 %v681, %v681
        %v811 = vmul.f32 %v722, %v722
        %v812 = vmul.f32 %v643, %v643
        %v813 = vmul.f32 %v684, %v684
        %v814 = vmul.f32 %v725, %v725
        %v815 = vmul.f32 %v646, %v646
        %v816 = vmul.f32 %v687, %v687
        %v817 = vmul.f32 %v728, %v728
        %v818 = vmul.f32 %v649, %v649
        %v819 = vmul.f32 %v690, %v690
        %v820 = vmul.f32 %v731, %v731
        %v821 = vmul.f32 %v652, %v652
        %v822 = vmul.f32 %v693, %v693
        %v823 = vmul.f32 %v734, %v734
        %v824 = vmul.f32 %v655, %v655
        %v825 = vmul.f32 %v696, %v696
        %v826 = vmul.f32 %v737, %v737
        %v827 = vmul.f32 %v658, %v658
        %v828 = vmul.f32 %v699, %v699
        %v829 = vmul.f32 %v740, %v740
        %830 = vmatpush.msra.mxu0 0.0
        %831 = vmatpush.msra.mxu0 0.0
        %832 = vmatpush.msra.mxu0 0.0
        %833 = vmatpush.msra.mxu0 0.0
        %834 = vmatpush.msra.mxu0 0.0
        %835 = vmatpush.msra.mxu0 0.0
        %836 = vmatpush.msra.mxu0 0.0
        %837 = vmatpush.msra.mxu0 0.0
        %838 = vmatpush.msra.mxu0 %v827
        %839 = vmatpush.msra.mxu0 %v824
        %840 = vmatpush.msra.mxu0 %v821
        %841 = vmatpush.msra.mxu0 %v818
        %842 = vmatpush.msra.mxu0 %v815
        %843 = vmatpush.msra.mxu0 %v812
        %844 = vmatpush.msra.mxu0 %v809
        %845 = vmatpush.msra.mxu0 %v806
        %846 = vmatmul.f32.gmra.mxu0 %v324
        %v847 = vpop.f32.mrf.mxu0
        %v848 = vadd.f32 0.0, %v847
        %849 = vdwg.mxu0
        %850 = vmatpush.msra.mxu0 0.0
        %851 = vmatpush.msra.mxu0 0.0
        %852 = vmatpush.msra.mxu0 0.0
        %853 = vmatpush.msra.mxu0 0.0
        %854 = vmatpush.msra.mxu0 0.0
        %855 = vmatpush.msra.mxu0 0.0
        %856 = vmatpush.msra.mxu0 0.0
        %857 = vmatpush.msra.mxu0 0.0
        %858 = vmatpush.msra.mxu0 %v828
        %859 = vmatpush.msra.mxu0 %v825
        %860 = vmatpush.msra.mxu0 %v822
        %861 = vmatpush.msra.mxu0 %v819
        %862 = vmatpush.msra.mxu0 %v816
        %863 = vmatpush.msra.mxu0 %v813
        %864 = vmatpush.msra.mxu0 %v810
        %865 = vmatpush.msra.mxu0 %v807
        %866 = vmatmul.f32.gmra.mxu0 %v324
        %v867 = vpop.f32.mrf.mxu0
        %v868 = vadd.f32 0.0, %v867
        %869 = vdwg.mxu0
        %870 = vmatpush.msra.mxu0 0.0
        %871 = vmatpush.msra.mxu0 0.0
        %872 = vmatpush.msra.mxu0 0.0
        %873 = vmatpush.msra.mxu0 0.0
        %874 = vmatpush.msra.mxu0 0.0
        %875 = vmatpush.msra.mxu0 0.0
        %876 = vmatpush.msra.mxu0 0.0
        %877 = vmatpush.msra.mxu0 0.0
        %878 = vmatpush.msra.mxu0 %v829
        %879 = vmatpush.msra.mxu0 %v826
        %880 = vmatpush.msra.mxu0 %v823
        %881 = vmatpush.msra.mxu0 %v820
        %882 = vmatpush.msra.mxu0 %v817
        %883 = vmatpush.msra.mxu0 %v814
        %884 = vmatpush.msra.mxu0 %v811
        %885 = vmatpush.msra.mxu0 %v808
        %886 = vmatmul.f32.gmra.mxu0 %v324
        %v887 = vpop.f32.mrf.mxu0
        %v888 = vadd.f32 0.0, %v887
        %889 = vdwg.mxu0
        %v890 = vmul.f32 %v764, 0.015625
        %v891 = vmul.f32 %v784, 0.015625
        %v892 = vmul.f32 %v804, 0.015625
        %v893 = vmul.f32 %v848, 0.015625
        %v894 = vmul.f32 %v868, 0.015625
        %v895 = vmul.f32 %v888, 0.015625
        %v896 = vmul.f32 %v890, %v890
        %v897 = vmul.f32 %v891, %v891
        %v898 = vmul.f32 %v892, %v892
        %v899 = vsub.f32 %v893, %v896
        %v900 = vsub.f32 %v894, %v897
        %v901 = vsub.f32 %v895, %v898
        %v902 = vmax.f32 %v899, 0.0
        %v903 = vmax.f32 %v900, 0.0
        %v904 = vmax.f32 %v901, 0.0
        %v905 = vadd.f32 %v902, 1e-05
        %v906 = vadd.f32 %v903, 1e-05
        %v907 = vadd.f32 %v904, 1e-05
        %v908 = vrsqrt.pop %v905
        %v909 = vmul.f32 %v908, %v905
        %v910 = vmul.f32 %v909, %v908
        %v911 = vmul.f32 0.5, %v910
        %v912 = vsub.f32 1.5, %v911
        %v913 = vmul.f32 %v908, %v912
        %vm914 = vweird.f32 %v905
        %vm915 = vweird.f32 %v908
        %vm916 = vmor %vm914, %vm915
        %v917 = vsel %vm916, %v908, %v913
        %v918 = vrsqrt.pop %v906
        %v919 = vmul.f32 %v918, %v906
        %v920 = vmul.f32 %v919, %v918
        %v921 = vmul.f32 0.5, %v920
        %v922 = vsub.f32 1.5, %v921
        %v923 = vmul.f32 %v918, %v922
        %vm924 = vweird.f32 %v906
        %vm925 = vweird.f32 %v918
        %vm926 = vmor %vm924, %vm925
        %v927 = vsel %vm926, %v918, %v923
        %v928 = vrsqrt.pop %v907
        %v929 = vmul.f32 %v928, %v907
        %v930 = vmul.f32 %v929, %v928
        %v931 = vmul.f32 0.5, %v930
        %v932 = vsub.f32 1.5, %v931
        %v933 = vmul.f32 %v928, %v932
        %vm934 = vweird.f32 %v907
        %vm935 = vweird.f32 %v928
        %vm936 = vmor %vm934, %vm935
        %v937 = vsel %vm936, %v928, %v933
        %v941 = vrot.slane %v927, 7
        %v942 = vrot.slane %v937, 6
        %vm943 = vcmask 1040384
        %v944 = vsel %vm943, %v917, %v941
        %vm945 = vcmask 1041408
        %v946 = vsel %vm945, %v944, %v942
        %v948 = vmul.f32 %v743, %v946
        %v950 = vperm.slane %v948, 0
        %v951 = vperm.slane %v948, 1
        %v952 = vperm.slane %v948, 2
        %v956 = vmul.f32 %v890, %v950
        %v957 = vmul.f32 %v891, %v951
        %v958 = vmul.f32 %v892, %v952
        %v962 = vrot.slane %v957, 7
        %v963 = vrot.slane %v958, 6
        %v964 = vsel %vm943, %v956, %v962
        %v965 = vsel %vm945, %v964, %v963
        %v967 = vsub.f32 %v745, %v965
        %v968 = vmul.f32 %v637, %v950
        %v969 = vmul.f32 %v678, %v951
        %v970 = vmul.f32 %v719, %v952
        %v971 = vmul.f32 %v640, %v950
        %v972 = vmul.f32 %v681, %v951
        %v973 = vmul.f32 %v722, %v952
        %v974 = vmul.f32 %v643, %v950
        %v975 = vmul.f32 %v684, %v951
        %v976 = vmul.f32 %v725, %v952
        %v977 = vmul.f32 %v646, %v950
        %v978 = vmul.f32 %v687, %v951
        %v979 = vmul.f32 %v728, %v952
        %v980 = vmul.f32 %v649, %v950
        %v981 = vmul.f32 %v690, %v951
        %v982 = vmul.f32 %v731, %v952
        %v983 = vmul.f32 %v652, %v950
        %v984 = vmul.f32 %v693, %v951
        %v985 = vmul.f32 %v734, %v952
        %v986 = vmul.f32 %v655, %v950
        %v987 = vmul.f32 %v696, %v951
        %v988 = vmul.f32 %v737, %v952
        %v989 = vmul.f32 %v658, %v950
        %v990 = vmul.f32 %v699, %v951
        %v991 = vmul.f32 %v740, %v952
        %v993 = vperm.slane %v967, 0
        %v994 = vperm.slane %v967, 1
        %v995 = vperm.slane %v967, 2
        %v999 = vadd.f32 %v968, %v993
        %v1000 = vadd.f32 %v969, %v994
        %v1001 = vadd.f32 %v970, %v995
        %v1002 = vadd.f32 %v971, %v993
        %v1003 = vadd.f32 %v972, %v994
        %v1004 = vadd.f32 %v973, %v995
        %v1005 = vadd.f32 %v974, %v993
        %v1006 = vadd.f32 %v975, %v994
        %v1007 = vadd.f32 %v976, %v995
        %v1008 = vadd.f32 %v977, %v993
        %v1009 = vadd.f32 %v978, %v994
        %v1010 = vadd.f32 %v979, %v995
        %v1011 = vadd.f32 %v980, %v993
        %v1012 = vadd.f32 %v981, %v994
        %v1013 = vadd.f32 %v982, %v995
        %v1014 = vadd.f32 %v983, %v993
        %v1015 = vadd.f32 %v984, %v994
        %v1016 = vadd.f32 %v985, %v995
        %v1017 = vadd.f32 %v986, %v993
        %v1018 = vadd.f32 %v987, %v994
        %v1019 = vadd.f32 %v988, %v995
        %v1020 = vadd.f32 %v989, %v993
        %v1021 = vadd.f32 %v990, %v994
        %v1022 = vadd.f32 %v991, %v995
        %v1023 = vtanh.pop %v999
        %v1024 = vtanh.pop %v1000
        %v1025 = vtanh.pop %v1001
        %v1026 = vtanh.pop %v1002
        %v1027 = vtanh.pop %v1003
        %v1028 = vtanh.pop %v1004
        %v1029 = vtanh.pop %v1005
        %v1030 = vtanh.pop %v1006
        %v1031 = vtanh.pop %v1007
        %v1032 = vtanh.pop %v1008
        %v1033 = vtanh.pop %v1009
        %v1034 = vtanh.pop %v1010
        %v1035 = vtanh.pop %v1011
        %v1036 = vtanh.pop %v1012
        %v1037 = vtanh.pop %v1013
        %v1038 = vtanh.pop %v1014
        %v1039 = vtanh.pop %v1015
        %v1040 = vtanh.pop %v1016
        %v1041 = vtanh.pop %v1017
        %v1042 = vtanh.pop %v1018
        %v1043 = vtanh.pop %v1019
        %v1044 = vtanh.pop %v1020
        %v1045 = vtanh.pop %v1021
        %v1046 = vtanh.pop %v1022
        %v1047 = vld [vmem:[#allocation2 + $0x318] sm:$0xff]
        %v1048 = vld [vmem:[#allocation2 + $0x330] sm:$0xff]
        %v1049 = vld [vmem:[#allocation2 + $0x348] sm:$0xff]
        %v1050 = vld [vmem:[#allocation2 + $0x360] sm:$0xff]
        %v1051 = vld [vmem:[#allocation2 + $0x378] sm:$0xff]
        %v1052 = vld [vmem:[#allocation2 + $0x390] sm:$0xff]
        %v1053 = vld [vmem:[#allocation2 + $0x3a8] sm:$0xff]
        %v1054 = vld [vmem:[#allocation2 + $0x3c0] sm:$0xff]
        %v1055 = vld [vmem:[#allocation2 + $0x3d8] sm:$0xff]
        %v1056 = vld [vmem:[#allocation2 + $0x3f0] sm:$0xff]
        %v1057 = vld [vmem:[#allocation2 + $0x408] sm:$0xff]
        %v1058 = vld [vmem:[#allocation2 + $0x420] sm:$0xff]
        %v1059 = vld [vmem:[#allocation2 + $0x438] sm:$0xff]
        %v1060 = vld [vmem:[#allocation2 + $0x450] sm:$0xff]
        %v1061 = vld [vmem:[#allocation2 + $0x468] sm:$0xff]
        %v1062 = vld [vmem:[#allocation2 + $0x480] sm:$0xff]
        %v1063 = vld [vmem:[#allocation2 + $0x498] sm:$0xff]
        %v1064 = vld [vmem:[#allocation2 + $0x4b0] sm:$0xff]
        %v1065 = vld [vmem:[#allocation2 + $0x4c8] sm:$0xff]
        %v1066 = vld [vmem:[#allocation2 + $0x4e0] sm:$0xff]
        %v1067 = vld [vmem:[#allocation2 + $0x4f8] sm:$0xff]
        %v1068 = vld [vmem:[#allocation2 + $0x510] sm:$0xff]
        %v1069 = vld [vmem:[#allocation2 + $0x528] sm:$0xff]
        %v1070 = vld [vmem:[#allocation2 + $0x540] sm:$0xff]
        %v1071 = vld [vmem:[#allocation2 + $0x558] sm:$0xff]
        %v1072 = vld [vmem:[#allocation2 + $0x570] sm:$0xff]
        %v1073 = vld [vmem:[#allocation2 + $0x588] sm:$0xff]
        %v1074 = vld [vmem:[#allocation2 + $0x5a0] sm:$0xff]
        %v1075 = vld [vmem:[#allocation2 + $0x5b8] sm:$0xff]
        %v1076 = vld [vmem:[#allocation2 + $0x5d0] sm:$0xff]
        %v1077 = vld [vmem:[#allocation2 + $0x5e8] sm:$0xff]
        %v1078 = vld [vmem:[#allocation2 + $0x600] sm:$0xff]
        %v1079 = vld [vmem:[#allocation2 + $0x618] sm:$0xff]
        %v1080 = vld [vmem:[#allocation2 + $0x630] sm:$0xff]
        %v1081 = vld [vmem:[#allocation2 + $0x648] sm:$0xff]
        %v1082 = vld [vmem:[#allocation2 + $0x660] sm:$0xff]
        %v1083 = vld [vmem:[#allocation2 + $0x678] sm:$0xff]
        %v1084 = vld [vmem:[#allocation2 + $0x690] sm:$0xff]
        %v1085 = vld [vmem:[#allocation2 + $0x6a8] sm:$0xff]
        %v1086 = vld [vmem:[#allocation2 + $0x6c0] sm:$0xff]
        %v1087 = vld [vmem:[#allocation2 + $0x6d8] sm:$0xff]
        %v1088 = vld [vmem:[#allocation2 + $0x6f0] sm:$0xff]
        %v1089 = vld [vmem:[#allocation2 + $0x708] sm:$0xff]
        %v1090 = vld [vmem:[#allocation2 + $0x720] sm:$0xff]
        %v1091 = vld [vmem:[#allocation2 + $0x738] sm:$0xff]
        %v1092 = vld [vmem:[#allocation2 + $0x750] sm:$0xff]
        %v1093 = vld [vmem:[#allocation2 + $0x768] sm:$0xff]
        %v1094 = vld [vmem:[#allocation2 + $0x780] sm:$0xff]
        %v1095 = vld [vmem:[#allocation4] ss:$0 sm:$0xff]
        %1096 = vmatpush.msra.mxu0 %v1062
        %1097 = vmatpush.msra.mxu0 %v1061
        %1098 = vmatpush.msra.mxu0 %v1060
        %1099 = vmatpush.msra.mxu0 %v1059
        %1100 = vmatpush.msra.mxu0 %v1058
        %1101 = vmatpush.msra.mxu0 %v1057
        %1102 = vmatpush.msra.mxu0 %v1056
        %1103 = vmatpush.msra.mxu0 %v1055
        %1104 = vmatpush.msra.mxu0 %v1054
        %1105 = vmatpush.msra.mxu0 %v1053
        %1106 = vmatpush.msra.mxu0 %v1052
        %1107 = vmatpush.msra.mxu0 %v1051
        %1108 = vmatpush.msra.mxu0 %v1050
        %1109 = vmatpush.msra.mxu0 %v1049
        %1110 = vmatpush.msra.mxu0 %v1048
        %1111 = vmatpush.msra.mxu0 %v1047
        %1112 = vmatmul.f32.gmra.mxu0 %v1023
        %v1113 = vpop.f32.mrf.mxu0
        %v1114 = vadd.f32 %v1095, %v1113
        %1115 = vmatmul.f32.gmra.mxu0 %v1026
        %v1116 = vpop.f32.mrf.mxu0
        %v1117 = vadd.f32 %v1095, %v1116
        %1118 = vmatmul.f32.gmra.mxu0 %v1029
        %v1119 = vpop.f32.mrf.mxu0
        %v1120 = vadd.f32 %v1095, %v1119
        %1121 = vmatmul.f32.gmra.mxu0 %v1032
        %v1122 = vpop.f32.mrf.mxu0
        %v1123 = vadd.f32 %v1095, %v1122
        %1124 = vmatmul.f32.gmra.mxu0 %v1035
        %v1125 = vpop.f32.mrf.mxu0
        %v1126 = vadd.f32 %v1095, %v1125
        %1127 = vmatmul.f32.gmra.mxu0 %v1038
        %v1128 = vpop.f32.mrf.mxu0
        %v1129 = vadd.f32 %v1095, %v1128
        %1130 = vmatmul.f32.gmra.mxu0 %v1041
        %v1131 = vpop.f32.mrf.mxu0
        %v1132 = vadd.f32 %v1095, %v1131
        %1133 = vmatmul.f32.gmra.mxu0 %v1044
        %v1134 = vpop.f32.mrf.mxu0
        %v1135 = vadd.f32 %v1095, %v1134
        %1136 = vdwg.mxu0
        %1137 = vmatpush.msra.mxu0 %v1078
        %1138 = vmatpush.msra.mxu0 %v1077
        %1139 = vmatpush.msra.mxu0 %v1076
        %1140 = vmatpush.msra.mxu0 %v1075
        %1141 = vmatpush.msra.mxu0 %v1074
        %1142 = vmatpush.msra.mxu0 %v1073
        %1143 = vmatpush.msra.mxu0 %v1072
        %1144 = vmatpush.msra.mxu0 %v1071
        %1145 = vmatpush.msra.mxu0 %v1070
        %1146 = vmatpush.msra.mxu0 %v1069
        %1147 = vmatpush.msra.mxu0 %v1068
        %1148 = vmatpush.msra.mxu0 %v1067
        %1149 = vmatpush.msra.mxu0 %v1066
        %1150 = vmatpush.msra.mxu0 %v1065
        %1151 = vmatpush.msra.mxu0 %v1064
        %1152 = vmatpush.msra.mxu0 %v1063
        %1153 = vmatmul.f32.gmra.mxu0 %v1024
        %v1154 = vpop.f32.mrf.mxu0
        %v1155 = vadd.f32 %v1114, %v1154
        %1156 = vmatmul.f32.gmra.mxu0 %v1027
        %v1157 = vpop.f32.mrf.mxu0
        %v1158 = vadd.f32 %v1117, %v1157
        %1159 = vmatmul.f32.gmra.mxu0 %v1030
        %v1160 = vpop.f32.mrf.mxu0
        %v1161 = vadd.f32 %v1120, %v1160
        %1162 = vmatmul.f32.gmra.mxu0 %v1033
        %v1163 = vpop.f32.mrf.mxu0
        %v1164 = vadd.f32 %v1123, %v1163
        %1165 = vmatmul.f32.gmra.mxu0 %v1036
        %v1166 = vpop.f32.mrf.mxu0
        %v1167 = vadd.f32 %v1126, %v1166
        %1168 = vmatmul.f32.gmra.mxu0 %v1039
        %v1169 = vpop.f32.mrf.mxu0
        %v1170 = vadd.f32 %v1129, %v1169
        %1171 = vmatmul.f32.gmra.mxu0 %v1042
        %v1172 = vpop.f32.mrf.mxu0
        %v1173 = vadd.f32 %v1132, %v1172
        %1174 = vmatmul.f32.gmra.mxu0 %v1045
        %v1175 = vpop.f32.mrf.mxu0
        %v1176 = vadd.f32 %v1135, %v1175
        %1177 = vdwg.mxu0
        %1178 = vmatpush.msra.mxu0 %v1094
        %1179 = vmatpush.msra.mxu0 %v1093
        %1180 = vmatpush.msra.mxu0 %v1092
        %1181 = vmatpush.msra.mxu0 %v1091
        %1182 = vmatpush.msra.mxu0 %v1090
        %1183 = vmatpush.msra.mxu0 %v1089
        %1184 = vmatpush.msra.mxu0 %v1088
        %1185 = vmatpush.msra.mxu0 %v1087
        %1186 = vmatpush.msra.mxu0 %v1086
        %1187 = vmatpush.msra.mxu0 %v1085
        %1188 = vmatpush.msra.mxu0 %v1084
        %1189 = vmatpush.msra.mxu0 %v1083
        %1190 = vmatpush.msra.mxu0 %v1082
        %1191 = vmatpush.msra.mxu0 %v1081
        %1192 = vmatpush.msra.mxu0 %v1080
        %1193 = vmatpush.msra.mxu0 %v1079
        %1194 = vmatmul.f32.gmra.mxu0 %v1025
        %v1195 = vpop.f32.mrf.mxu0
        %v1196 = vadd.f32 %v1155, %v1195
        %1197 = vmatmul.f32.gmra.mxu0 %v1028
        %v1198 = vpop.f32.mrf.mxu0
        %v1199 = vadd.f32 %v1158, %v1198
        %1200 = vmatmul.f32.gmra.mxu0 %v1031
        %v1201 = vpop.f32.mrf.mxu0
        %v1202 = vadd.f32 %v1161, %v1201
        %1203 = vmatmul.f32.gmra.mxu0 %v1034
        %v1204 = vpop.f32.mrf.mxu0
        %v1205 = vadd.f32 %v1164, %v1204
        %1206 = vmatmul.f32.gmra.mxu0 %v1037
        %v1207 = vpop.f32.mrf.mxu0
        %v1208 = vadd.f32 %v1167, %v1207
        %1209 = vmatmul.f32.gmra.mxu0 %v1040
        %v1210 = vpop.f32.mrf.mxu0
        %v1211 = vadd.f32 %v1170, %v1210
        %1212 = vmatmul.f32.gmra.mxu0 %v1043
        %v1213 = vpop.f32.mrf.mxu0
        %v1214 = vadd.f32 %v1173, %v1213
        %1215 = vmatmul.f32.gmra.mxu0 %v1046
        %v1216 = vpop.f32.mrf.mxu0
        %v1217 = vadd.f32 %v1176, %v1216
        %1218 = vdwg.mxu0
        %v1219 = vld [vmem:[#allocation2 + $0x798] sm:$0xff]
        %v1220 = vld [vmem:[#allocation2 + $0x7a0] sm:$0xff]
        %v1221 = vld [vmem:[#allocation2 + $0x7a8] sm:$0xff]
        %v1222 = vld [vmem:[#allocation2 + $0x7b0] sm:$0xff]
        %v1223 = vld [vmem:[#allocation2 + $0x7b8] sm:$0xff]
        %v1224 = vld [vmem:[#allocation2 + $0x7c0] sm:$0xff]
        %v1225 = vld [vmem:[#allocation2 + $0x7c8] sm:$0xff]
        %v1226 = vld [vmem:[#allocation2 + $0x7d0] sm:$0xff]
        %v1227 = vld [vmem:[#allocation2 + $0x7d8] sm:$0xff]
        %v1228 = vld [vmem:[#allocation2 + $0x7e0] sm:$0xff]
        %v1229 = vld [vmem:[#allocation2 + $0x7e8] sm:$0xff]
        %v1230 = vld [vmem:[#allocation2 + $0x7f0] sm:$0xff]
        %v1231 = vld [vmem:[#allocation2 + $0x7f8] sm:$0xff]
        %v1232 = vld [vmem:[#allocation2 + $0x800] sm:$0xff]
        %v1233 = vld [vmem:[#allocation2 + $0x808] sm:$0xff]
        %v1234 = vld [vmem:[#allocation2 + $0x810] sm:$0xff]
        %v1235 = vld [vmem:[#allocation2 + $0x818] sm:$0xff]
        %v1236 = vld [vmem:[#allocation2 + $0x820] sm:$0xff]
        %v1237 = vld [vmem:[#allocation2 + $0x828] sm:$0xff]
        %v1238 = vld [vmem:[#allocation2 + $0x830] sm:$0xff]
        %v1239 = vld [vmem:[#allocation2 + $0x838] sm:$0xff]
        %v1240 = vld [vmem:[#allocation2 + $0x840] sm:$0xff]
        %v1241 = vld [vmem:[#allocation2 + $0x848] sm:$0xff]
        %v1242 = vld [vmem:[#allocation2 + $0x850] sm:$0xff]
        %v1243 = vld [vmem:[#allocation2 + $0x858] sm:$0xff]
        %v1244 = vld [vmem:[#allocation2 + $0x860] sm:$0xff]
        %v1245 = vld [vmem:[#allocation2 + $0x868] sm:$0xff]
        %v1246 = vld [vmem:[#allocation2 + $0x870] sm:$0xff]
        %v1247 = vld [vmem:[#allocation2 + $0x878] sm:$0xff]
        %v1248 = vld [vmem:[#allocation2 + $0x880] sm:$0xff]
        %v1249 = vld [vmem:[#allocation2 + $0x888] sm:$0xff]
        %v1250 = vld [vmem:[#allocation2 + $0x890] sm:$0xff]
        %v1251 = vld [vmem:[#allocation2 + $0x898] sm:$0xff]
        %v1252 = vld [vmem:[#allocation2 + $0x8a0] sm:$0xff]
        %v1253 = vld [vmem:[#allocation2 + $0x8a8] sm:$0xff]
        %v1254 = vld [vmem:[#allocation2 + $0x8b0] sm:$0xff]
        %v1255 = vld [vmem:[#allocation2 + $0x8b8] sm:$0xff]
        %v1256 = vld [vmem:[#allocation2 + $0x8c0] sm:$0xff]
        %v1257 = vld [vmem:[#allocation2 + $0x8c8] sm:$0xff]
        %v1258 = vld [vmem:[#allocation2 + $0x8d0] sm:$0xff]
        %v1259 = vld [vmem:[#allocation2 + $0x8d8] sm:$0xff]
        %v1260 = vld [vmem:[#allocation2 + $0x8e0] sm:$0xff]
        %v1261 = vld [vmem:[#allocation2 + $0x8e8] sm:$0xff]
        %v1262 = vld [vmem:[#allocation2 + $0x8f0] sm:$0xff]
        %v1263 = vld [vmem:[#allocation2 + $0x8f8] sm:$0xff]
        %v1264 = vld [vmem:[#allocation2 + $0x900] sm:$0xff]
        %v1265 = vld [vmem:[#allocation2 + $0x908] sm:$0xff]
        %v1266 = vld [vmem:[#allocation2 + $0x910] sm:$0xff]
        %1267 = vmatpush.msra.mxu0 %v1264
        %1268 = vmatpush.msra.mxu0 %v1261
        %1269 = vmatpush.msra.mxu0 %v1258
        %1270 = vmatpush.msra.mxu0 %v1255
        %1271 = vmatpush.msra.mxu0 %v1252
        %1272 = vmatpush.msra.mxu0 %v1249
        %1273 = vmatpush.msra.mxu0 %v1246
        %1274 = vmatpush.msra.mxu0 %v1243
        %1275 = vmatpush.msra.mxu0 %v1240
        %1276 = vmatpush.msra.mxu0 %v1237
        %1277 = vmatpush.msra.mxu0 %v1234
        %1278 = vmatpush.msra.mxu0 %v1231
        %1279 = vmatpush.msra.mxu0 %v1228
        %1280 = vmatpush.msra.mxu0 %v1225
        %1281 = vmatpush.msra.mxu0 %v1222
        %1282 = vmatpush.msra.mxu0 %v1219
        %1283 = vmatmul.f32.gmra.mxu0 %v1196
        %v1284 = vpop.f32.mrf.mxu0
        %v1285 = vadd.f32 0.0, %v1284
        %1286 = vmatmul.f32.gmra.mxu0 %v1199
        %v1287 = vpop.f32.mrf.mxu0
        %v1288 = vadd.f32 0.0, %v1287
        %1289 = vmatmul.f32.gmra.mxu0 %v1202
        %v1290 = vpop.f32.mrf.mxu0
        %v1291 = vadd.f32 0.0, %v1290
        %1292 = vmatmul.f32.gmra.mxu0 %v1205
        %v1293 = vpop.f32.mrf.mxu0
        %v1294 = vadd.f32 0.0, %v1293
        %1295 = vmatmul.f32.gmra.mxu0 %v1208
        %v1296 = vpop.f32.mrf.mxu0
        %v1297 = vadd.f32 0.0, %v1296
        %1298 = vmatmul.f32.gmra.mxu0 %v1211
        %v1299 = vpop.f32.mrf.mxu0
        %v1300 = vadd.f32 0.0, %v1299
        %1301 = vmatmul.f32.gmra.mxu0 %v1214
        %v1302 = vpop.f32.mrf.mxu0
        %v1303 = vadd.f32 0.0, %v1302
        %1304 = vmatmul.f32.gmra.mxu0 %v1217
        %v1305 = vpop.f32.mrf.mxu0
        %v1306 = vadd.f32 0.0, %v1305
        %1307 = vdwg.mxu0
        %1308 = vmatpush.msra.mxu0 %v1265
        %1309 = vmatpush.msra.mxu0 %v1262
        %1310 = vmatpush.msra.mxu0 %v1259
        %1311 = vmatpush.msra.mxu0 %v1256
        %1312 = vmatpush.msra.mxu0 %v1253
        %1313 = vmatpush.msra.mxu0 %v1250
        %1314 = vmatpush.msra.mxu0 %v1247
        %1315 = vmatpush.msra.mxu0 %v1244
        %1316 = vmatpush.msra.mxu0 %v1241
        %1317 = vmatpush.msra.mxu0 %v1238
        %1318 = vmatpush.msra.mxu0 %v1235
        %1319 = vmatpush.msra.mxu0 %v1232
        %1320 = vmatpush.msra.mxu0 %v1229
        %1321 = vmatpush.msra.mxu0 %v1226
        %1322 = vmatpush.msra.mxu0 %v1223
        %1323 = vmatpush.msra.mxu0 %v1220
        %1324 = vmatmul.f32.gmra.mxu0 %v1196
        %v1325 = vpop.f32.mrf.mxu0
        %v1326 = vadd.f32 0.0, %v1325
        %1327 = vmatmul.f32.gmra.mxu0 %v1199
        %v1328 = vpop.f32.mrf.mxu0
        %v1329 = vadd.f32 0.0, %v1328
        %1330 = vmatmul.f32.gmra.mxu0 %v1202
        %v1331 = vpop.f32.mrf.mxu0
        %v1332 = vadd.f32 0.0, %v1331
        %1333 = vmatmul.f32.gmra.mxu0 %v1205
        %v1334 = vpop.f32.mrf.mxu0
        %v1335 = vadd.f32 0.0, %v1334
        %1336 = vmatmul.f32.gmra.mxu0 %v1208
        %v1337 = vpop.f32.mrf.mxu0
        %v1338 = vadd.f32 0.0, %v1337
        %1339 = vmatmul.f32.gmra.mxu0 %v1211
        %v1340 = vpop.f32.mrf.mxu0
        %v1341 = vadd.f32 0.0, %v1340
        %1342 = vmatmul.f32.gmra.mxu0 %v1214
        %v1343 = vpop.f32.mrf.mxu0
        %v1344 = vadd.f32 0.0, %v1343
        %1345 = vmatmul.f32.gmra.mxu0 %v1217
        %v1346 = vpop.f32.mrf.mxu0
        %v1347 = vadd.f32 0.0, %v1346
        %1348 = vdwg.mxu0
        %1349 = vmatpush.msra.mxu0 %v1266
        %1350 = vmatpush.msra.mxu0 %v1263
        %1351 = vmatpush.msra.mxu0 %v1260
        %1352 = vmatpush.msra.mxu0 %v1257
        %1353 = vmatpush.msra.mxu0 %v1254
        %1354 = vmatpush.msra.mxu0 %v1251
        %1355 = vmatpush.msra.mxu0 %v1248
        %1356 = vmatpush.msra.mxu0 %v1245
        %1357 = vmatpush.msra.mxu0 %v1242
        %1358 = vmatpush.msra.mxu0 %v1239
        %1359 = vmatpush.msra.mxu0 %v1236
        %1360 = vmatpush.msra.mxu0 %v1233
        %1361 = vmatpush.msra.mxu0 %v1230
        %1362 = vmatpush.msra.mxu0 %v1227
        %1363 = vmatpush.msra.mxu0 %v1224
        %1364 = vmatpush.msra.mxu0 %v1221
        %1365 = vmatmul.f32.gmra.mxu0 %v1196
        %v1366 = vpop.f32.mrf.mxu0
        %v1367 = vadd.f32 0.0, %v1366
        %1368 = vmatmul.f32.gmra.mxu0 %v1199
        %v1369 = vpop.f32.mrf.mxu0
        %v1370 = vadd.f32 0.0, %v1369
        %1371 = vmatmul.f32.gmra.mxu0 %v1202
        %v1372 = vpop.f32.mrf.mxu0
        %v1373 = vadd.f32 0.0, %v1372
        %1374 = vmatmul.f32.gmra.mxu0 %v1205
        %v1375 = vpop.f32.mrf.mxu0
        %v1376 = vadd.f32 0.0, %v1375
        %1377 = vmatmul.f32.gmra.mxu0 %v1208
        %v1378 = vpop.f32.mrf.mxu0
        %v1379 = vadd.f32 0.0, %v1378
        %1380 = vmatmul.f32.gmra.mxu0 %v1211
        %v1381 = vpop.f32.mrf.mxu0
        %v1382 = vadd.f32 0.0, %v1381
        %1383 = vmatmul.f32.gmra.mxu0 %v1214
        %v1384 = vpop.f32.mrf.mxu0
        %v1385 = vadd.f32 0.0, %v1384
        %1386 = vmatmul.f32.gmra.mxu0 %v1217
        %v1387 = vpop.f32.mrf.mxu0
        %v1388 = vadd.f32 0.0, %v1387
        %1389 = vdwg.mxu0
        %v1390 = vld [vmem:[#allocation2 + $0x918] sm:$0xff]
        %v1391 = vld [vmem:[#allocation2 + $0x930] sm:$0xff]
        %v1392 = vld [vmem:[#allocation2 + $0x948] sm:$0xff]
        %v1393 = vld [vmem:[#allocation2 + $0x960] sm:$0xff]
        %v1394 = vld [vmem:[#allocation2 + $0x978] sm:$0xff]
        %v1395 = vld [vmem:[#allocation2 + $0x990] sm:$0xff]
        %v1396 = vld [vmem:[#allocation2 + $0x9a8] sm:$0xff]
        %v1397 = vld [vmem:[#allocation2 + $0x9c0] sm:$0xff]
        %v1398 = vld [vmem:[#allocation2 + $0x9d8] sm:$0xff]
        %v1399 = vld [vmem:[#allocation2 + $0x9f0] sm:$0xff]
        %v1400 = vld [vmem:[#allocation2 + $0xa08] sm:$0xff]
        %v1401 = vld [vmem:[#allocation2 + $0xa20] sm:$0xff]
        %v1402 = vld [vmem:[#allocation2 + $0xa38] sm:$0xff]
        %v1403 = vld [vmem:[#allocation2 + $0xa50] sm:$0xff]
        %v1404 = vld [vmem:[#allocation2 + $0xa68] sm:$0xff]
        %v1405 = vld [vmem:[#allocation2 + $0xa80] sm:$0xff]
        %v1406 = vld [vmem:[#allocation2 + $0xa98] sm:$0xff]
        %v1407 = vld [vmem:[#allocation2 + $0xab0] sm:$0xff]
        %v1408 = vld [vmem:[#allocation2 + $0xac8] sm:$0xff]
        %v1409 = vld [vmem:[#allocation2 + $0xae0] sm:$0xff]
        %v1410 = vld [vmem:[#allocation2 + $0xaf8] sm:$0xff]
        %v1411 = vld [vmem:[#allocation2 + $0xb10] sm:$0xff]
        %v1412 = vld [vmem:[#allocation2 + $0xb28] sm:$0xff]
        %v1413 = vld [vmem:[#allocation2 + $0xb40] sm:$0xff]
        %v1414 = vld [vmem:[#allocation2 + $0xb58] sm:$0xff]
        %v1415 = vld [vmem:[#allocation2 + $0xb70] sm:$0xff]
        %v1416 = vld [vmem:[#allocation2 + $0xb88] sm:$0xff]
        %v1417 = vld [vmem:[#allocation2 + $0xba0] sm:$0xff]
        %v1418 = vld [vmem:[#allocation2 + $0xbb8] sm:$0xff]
        %v1419 = vld [vmem:[#allocation2 + $0xbd0] sm:$0xff]
        %v1420 = vld [vmem:[#allocation2 + $0xbe8] sm:$0xff]
        %v1421 = vld [vmem:[#allocation2 + $0xc00] sm:$0xff]
        %v1422 = vld [vmem:[#allocation2 + $0xc18] sm:$0xff]
        %v1423 = vld [vmem:[#allocation2 + $0xc30] sm:$0xff]
        %v1424 = vld [vmem:[#allocation2 + $0xc48] sm:$0xff]
        %v1425 = vld [vmem:[#allocation2 + $0xc60] sm:$0xff]
        %v1426 = vld [vmem:[#allocation2 + $0xc78] sm:$0xff]
        %v1427 = vld [vmem:[#allocation2 + $0xc90] sm:$0xff]
        %v1428 = vld [vmem:[#allocation2 + $0xca8] sm:$0xff]
        %v1429 = vld [vmem:[#allocation2 + $0xcc0] sm:$0xff]
        %v1430 = vld [vmem:[#allocation2 + $0xcd8] sm:$0xff]
        %v1431 = vld [vmem:[#allocation2 + $0xcf0] sm:$0xff]
        %v1432 = vld [vmem:[#allocation2 + $0xd08] sm:$0xff]
        %v1433 = vld [vmem:[#allocation2 + $0xd20] sm:$0xff]
        %v1434 = vld [vmem:[#allocation2 + $0xd38] sm:$0xff]
        %v1435 = vld [vmem:[#allocation2 + $0xd50] sm:$0xff]
        %v1436 = vld [vmem:[#allocation2 + $0xd68] sm:$0xff]
        %v1437 = vld [vmem:[#allocation2 + $0xd80] sm:$0xff]
        %1438 = vmatpush.msra.mxu0 %v1405
        %1439 = vmatpush.msra.mxu0 %v1404
        %1440 = vmatpush.msra.mxu0 %v1403
        %1441 = vmatpush.msra.mxu0 %v1402
        %1442 = vmatpush.msra.mxu0 %v1401
        %1443 = vmatpush.msra.mxu0 %v1400
        %1444 = vmatpush.msra.mxu0 %v1399
        %1445 = vmatpush.msra.mxu0 %v1398
        %1446 = vmatpush.msra.mxu0 %v1397
        %1447 = vmatpush.msra.mxu0 %v1396
        %1448 = vmatpush.msra.mxu0 %v1395
        %1449 = vmatpush.msra.mxu0 %v1394
        %1450 = vmatpush.msra.mxu0 %v1393
        %1451 = vmatpush.msra.mxu0 %v1392
        %1452 = vmatpush.msra.mxu0 %v1391
        %1453 = vmatpush.msra.mxu0 %v1390
        %1454 = vmatmul.f32.gmra.mxu0 %v1285
        %v1455 = vpop.f32.mrf.mxu0
        %v1456 = vadd.f32 0.0, %v1455
        %1457 = vmatmul.f32.gmra.mxu0 %v1288
        %v1458 = vpop.f32.mrf.mxu0
        %v1459 = vadd.f32 0.0, %v1458
        %1460 = vmatmul.f32.gmra.mxu0 %v1291
        %v1461 = vpop.f32.mrf.mxu0
        %v1462 = vadd.f32 0.0, %v1461
        %1463 = vmatmul.f32.gmra.mxu0 %v1294
        %v1464 = vpop.f32.mrf.mxu0
        %v1465 = vadd.f32 0.0, %v1464
        %1466 = vmatmul.f32.gmra.mxu0 %v1297
        %v1467 = vpop.f32.mrf.mxu0
        %v1468 = vadd.f32 0.0, %v1467
        %1469 = vmatmul.f32.gmra.mxu0 %v1300
        %v1470 = vpop.f32.mrf.mxu0
        %v1471 = vadd.f32 0.0, %v1470
        %1472 = vmatmul.f32.gmra.mxu0 %v1303
        %v1473 = vpop.f32.mrf.mxu0
        %v1474 = vadd.f32 0.0, %v1473
        %1475 = vmatmul.f32.gmra.mxu0 %v1306
        %v1476 = vpop.f32.mrf.mxu0
        %v1477 = vadd.f32 0.0, %v1476
        %1478 = vdwg.mxu0
        %1479 = vmatpush.msra.mxu0 %v1421
        %1480 = vmatpush.msra.mxu0 %v1420
        %1481 = vmatpush.msra.mxu0 %v1419
        %1482 = vmatpush.msra.mxu0 %v1418
        %1483 = vmatpush.msra.mxu0 %v1417
        %1484 = vmatpush.msra.mxu0 %v1416
        %1485 = vmatpush.msra.mxu0 %v1415
        %1486 = vmatpush.msra.mxu0 %v1414
        %1487 = vmatpush.msra.mxu0 %v1413
        %1488 = vmatpush.msra.mxu0 %v1412
        %1489 = vmatpush.msra.mxu0 %v1411
        %1490 = vmatpush.msra.mxu0 %v1410
        %1491 = vmatpush.msra.mxu0 %v1409
        %1492 = vmatpush.msra.mxu0 %v1408
        %1493 = vmatpush.msra.mxu0 %v1407
        %1494 = vmatpush.msra.mxu0 %v1406
        %1495 = vmatmul.f32.gmra.mxu0 %v1326
        %v1496 = vpop.f32.mrf.mxu0
        %v1497 = vadd.f32 %v1456, %v1496
        %1498 = vmatmul.f32.gmra.mxu0 %v1329
        %v1499 = vpop.f32.mrf.mxu0
        %v1500 = vadd.f32 %v1459, %v1499
        %1501 = vmatmul.f32.gmra.mxu0 %v1332
        %v1502 = vpop.f32.mrf.mxu0
        %v1503 = vadd.f32 %v1462, %v1502
        %1504 = vmatmul.f32.gmra.mxu0 %v1335
        %v1505 = vpop.f32.mrf.mxu0
        %v1506 = vadd.f32 %v1465, %v1505
        %1507 = vmatmul.f32.gmra.mxu0 %v1338
        %v1508 = vpop.f32.mrf.mxu0
        %v1509 = vadd.f32 %v1468, %v1508
        %1510 = vmatmul.f32.gmra.mxu0 %v1341
        %v1511 = vpop.f32.mrf.mxu0
        %v1512 = vadd.f32 %v1471, %v1511
        %1513 = vmatmul.f32.gmra.mxu0 %v1344
        %v1514 = vpop.f32.mrf.mxu0
        %v1515 = vadd.f32 %v1474, %v1514
        %1516 = vmatmul.f32.gmra.mxu0 %v1347
        %v1517 = vpop.f32.mrf.mxu0
        %v1518 = vadd.f32 %v1477, %v1517
        %1519 = vdwg.mxu0
        %1520 = vmatpush.msra.mxu0 %v1437
        %1521 = vmatpush.msra.mxu0 %v1436
        %1522 = vmatpush.msra.mxu0 %v1435
        %1523 = vmatpush.msra.mxu0 %v1434
        %1524 = vmatpush.msra.mxu0 %v1433
        %1525 = vmatpush.msra.mxu0 %v1432
        %1526 = vmatpush.msra.mxu0 %v1431
        %1527 = vmatpush.msra.mxu0 %v1430
        %1528 = vmatpush.msra.mxu0 %v1429
        %1529 = vmatpush.msra.mxu0 %v1428
        %1530 = vmatpush.msra.mxu0 %v1427
        %1531 = vmatpush.msra.mxu0 %v1426
        %1532 = vmatpush.msra.mxu0 %v1425
        %1533 = vmatpush.msra.mxu0 %v1424
        %1534 = vmatpush.msra.mxu0 %v1423
        %1535 = vmatpush.msra.mxu0 %v1422
        %1536 = vmatmul.f32.gmra.mxu0 %v1367
        %v1537 = vpop.f32.mrf.mxu0
        %v1538 = vadd.f32 %v1497, %v1537
        %1539 = vmatmul.f32.gmra.mxu0 %v1370
        %v1540 = vpop.f32.mrf.mxu0
        %v1541 = vadd.f32 %v1500, %v1540
        %1542 = vmatmul.f32.gmra.mxu0 %v1373
        %v1543 = vpop.f32.mrf.mxu0
        %v1544 = vadd.f32 %v1503, %v1543
        %1545 = vmatmul.f32.gmra.mxu0 %v1376
        %v1546 = vpop.f32.mrf.mxu0
        %v1547 = vadd.f32 %v1506, %v1546
        %1548 = vmatmul.f32.gmra.mxu0 %v1379
        %v1549 = vpop.f32.mrf.mxu0
        %v1550 = vadd.f32 %v1509, %v1549
        %1551 = vmatmul.f32.gmra.mxu0 %v1382
        %v1552 = vpop.f32.mrf.mxu0
        %v1553 = vadd.f32 %v1512, %v1552
        %1554 = vmatmul.f32.gmra.mxu0 %v1385
        %v1555 = vpop.f32.mrf.mxu0
        %v1556 = vadd.f32 %v1515, %v1555
        %1557 = vmatmul.f32.gmra.mxu0 %v1388
        %v1558 = vpop.f32.mrf.mxu0
        %v1559 = vadd.f32 %v1518, %v1558
        %1560 = vdwg.mxu0
        %v1561 = vld [vmem:[#allocation4 + $0x7] ss:$0 sm:$0xff]
        %v1562 = vld [vmem:[#allocation4 + $0x18] ss:$0 sm:$0xff]
        %1563 = vmatpush.msra.mxu0 0.0
        %1564 = vmatpush.msra.mxu0 0.0
        %1565 = vmatpush.msra.mxu0 0.0
        %1566 = vmatpush.msra.mxu0 0.0
        %1567 = vmatpush.msra.mxu0 0.0
        %1568 = vmatpush.msra.mxu0 0.0
        %1569 = vmatpush.msra.mxu0 0.0
        %1570 = vmatpush.msra.mxu0 0.0
        %1571 = vmatpush.msra.mxu0 %v1559
        %1572 = vmatpush.msra.mxu0 %v1556
        %1573 = vmatpush.msra.mxu0 %v1553
        %1574 = vmatpush.msra.mxu0 %v1550
        %1575 = vmatpush.msra.mxu0 %v1547
        %1576 = vmatpush.msra.mxu0 %v1544
        %1577 = vmatpush.msra.mxu0 %v1541
        %1578 = vmatpush.msra.mxu0 %v1538
        %1579 = vmatmul.f32.gmra.mxu0 %v324
        %v1580 = vpop.f32.mrf.mxu0
        %v1581 = vadd.f32 0.0, %v1580
        %1582 = vdwg.mxu0
        %v1583 = vmul.f32 %v1538, %v1538
        %v1584 = vmul.f32 %v1541, %v1541
        %v1585 = vmul.f32 %v1544, %v1544
        %v1586 = vmul.f32 %v1547, %v1547
        %v1587 = vmul.f32 %v1550, %v1550
        %v1588 = vmul.f32 %v1553, %v1553
        %v1589 = vmul.f32 %v1556, %v1556
        %v1590 = vmul.f32 %v1559, %v1559
        %1591 = vmatpush.msra.mxu0 0.0
        %1592 = vmatpush.msra.mxu0 0.0
        %1593 = vmatpush.msra.mxu0 0.0
        %1594 = vmatpush.msra.mxu0 0.0
        %1595 = vmatpush.msra.mxu0 0.0
        %1596 = vmatpush.msra.mxu0 0.0
        %1597 = vmatpush.msra.mxu0 0.0
        %1598 = vmatpush.msra.mxu0 0.0
        %1599 = vmatpush.msra.mxu0 %v1590
        %1600 = vmatpush.msra.mxu0 %v1589
        %1601 = vmatpush.msra.mxu0 %v1588
        %1602 = vmatpush.msra.mxu0 %v1587
        %1603 = vmatpush.msra.mxu0 %v1586
        %1604 = vmatpush.msra.mxu0 %v1585
        %1605 = vmatpush.msra.mxu0 %v1584
        %1606 = vmatpush.msra.mxu0 %v1583
        %1607 = vmatmul.f32.gmra.mxu0 %v324
        %v1608 = vpop.f32.mrf.mxu0
        %v1609 = vadd.f32 0.0, %v1608
        %1610 = vdwg.mxu0
        %v1611 = vmul.f32 %v1581, 0.015625
        %v1612 = vmul.f32 %v1609, 0.015625
        %v1613 = vmul.f32 %v1611, %v1611
        %v1614 = vsub.f32 %v1612, %v1613
        %v1615 = vmax.f32 %v1614, 0.0
        %v1616 = vadd.f32 %v1615, 1e-05
        %v1617 = vrsqrt.pop %v1616
        %v1618 = vmul.f32 %v1617, %v1616
        %v1619 = vmul.f32 %v1618, %v1617
        %v1620 = vmul.f32 0.5, %v1619
        %v1621 = vsub.f32 1.5, %v1620
        %v1622 = vmul.f32 %v1617, %v1621
        %vm1623 = vweird.f32 %v1616
        %vm1624 = vweird.f32 %v1617
        %vm1625 = vmor %vm1623, %vm1624
        %v1626 = vsel %vm1625, %v1617, %v1622
        %v1627 = vmul.f32 %v1561, %v1626
        %v1628 = vmul.f32 %v1611, %v1627
        %v1629 = vsub.f32 %v1562, %v1628
        %v1630 = vperm.slane %v1627, 0
        %v1631 = vmul.f32 %v1538, %v1630
        %v1632 = vmul.f32 %v1541, %v1630
        %v1633 = vmul.f32 %v1544, %v1630
        %v1634 = vmul.f32 %v1547, %v1630
        %v1635 = vmul.f32 %v1550, %v1630
        %v1636 = vmul.f32 %v1553, %v1630
        %v1637 = vmul.f32 %v1556, %v1630
        %v1638 = vmul.f32 %v1559, %v1630
        %v1639 = vperm.slane %v1629, 0
        %v1640 = vadd.f32 %v1631, %v1639
        %v1641 = vadd.f32 %v1632, %v1639
        %v1642 = vadd.f32 %v1633, %v1639
        %v1643 = vadd.f32 %v1634, %v1639
        %v1644 = vadd.f32 %v1635, %v1639
        %v1645 = vadd.f32 %v1636, %v1639
        %v1646 = vadd.f32 %v1637, %v1639
        %v1647 = vadd.f32 %v1638, %v1639
        %v1648 = vtanh.pop %v1640
        %v1649 = vtanh.pop %v1641
        %v1650 = vtanh.pop %v1642
        %v1651 = vtanh.pop %v1643
        %v1652 = vtanh.pop %v1644
        %v1653 = vtanh.pop %v1645
        %v1654 = vtanh.pop %v1646
        %v1655 = vtanh.pop %v1647
        %v1656 = vld [vmem:[#allocation2 + $0xd98] sm:$0xff]
        %v1657 = vld [vmem:[#allocation2 + $0xdb0] sm:$0xff]
        %v1658 = vld [vmem:[#allocation2 + $0xdc8] sm:$0xff]
        %v1659 = vld [vmem:[#allocation2 + $0xde0] sm:$0xff]
        %v1660 = vld [vmem:[#allocation2 + $0xdf8] sm:$0xff]
        %v1661 = vld [vmem:[#allocation2 + $0xe10] sm:$0xff]
        %v1662 = vld [vmem:[#allocation2 + $0xe28] sm:$0xff]
        %v1663 = vld [vmem:[#allocation2 + $0xe40] sm:$0xff]
        %v1664 = vld [vmem:[#allocation2 + $0xe58] sm:$0xff]
        %v1665 = vld [vmem:[#allocation2 + $0xe70] sm:$0xff]
        %v1666 = vld [vmem:[#allocation2 + $0xe88] sm:$0xff]
        %v1667 = vld [vmem:[#allocation2 + $0xea0] sm:$0xff]
        %v1668 = vld [vmem:[#allocation2 + $0xeb8] sm:$0xff]
        %v1669 = vld [vmem:[#allocation2 + $0xed0] sm:$0xff]
        %v1670 = vld [vmem:[#allocation2 + $0xee8] sm:$0xff]
        %v1671 = vld [vmem:[#allocation2 + $0xf00] sm:$0xff]
        %1672 = vmatpush.msra.mxu0 %v1671
        %1673 = vmatpush.msra.mxu0 %v1670
        %1674 = vmatpush.msra.mxu0 %v1669
        %1675 = vmatpush.msra.mxu0 %v1668
        %1676 = vmatpush.msra.mxu0 %v1667
        %1677 = vmatpush.msra.mxu0 %v1666
        %1678 = vmatpush.msra.mxu0 %v1665
        %1679 = vmatpush.msra.mxu0 %v1664
        %1680 = vmatpush.msra.mxu0 %v1663
        %1681 = vmatpush.msra.mxu0 %v1662
        %1682 = vmatpush.msra.mxu0 %v1661
        %1683 = vmatpush.msra.mxu0 %v1660
        %1684 = vmatpush.msra.mxu0 %v1659
        %1685 = vmatpush.msra.mxu0 %v1658
        %1686 = vmatpush.msra.mxu0 %v1657
        %1687 = vmatpush.msra.mxu0 %v1656
        %1688 = vmatmul.f32.gmra.mxu0 %v1648
        %v1689 = vpop.f32.mrf.mxu0
        %v1690 = vadd.f32 0.0, %v1689
        %1691 = vmatmul.f32.gmra.mxu0 %v1649
        %v1692 = vpop.f32.mrf.mxu0
        %v1693 = vadd.f32 0.0, %v1692
        %1694 = vmatmul.f32.gmra.mxu0 %v1650
        %v1695 = vpop.f32.mrf.mxu0
        %v1696 = vadd.f32 0.0, %v1695
        %1697 = vmatmul.f32.gmra.mxu0 %v1651
        %v1698 = vpop.f32.mrf.mxu0
        %v1699 = vadd.f32 0.0, %v1698
        %1700 = vmatmul.f32.gmra.mxu0 %v1652
        %v1701 = vpop.f32.mrf.mxu0
        %v1702 = vadd.f32 0.0, %v1701
        %1703 = vmatmul.f32.gmra.mxu0 %v1653
        %v1704 = vpop.f32.mrf.mxu0
        %v1705 = vadd.f32 0.0, %v1704
        %1706 = vmatmul.f32.gmra.mxu0 %v1654
        %v1707 = vpop.f32.mrf.mxu0
        %v1708 = vadd.f32 0.0, %v1707
        %1709 = vmatmul.f32.gmra.mxu0 %v1655
        %v1710 = vpop.f32.mrf.mxu0
        %v1711 = vadd.f32 0.0, %v1710
        %1712 = vdwg.mxu0
        %v1713 = vld [vmem:[#allocation4 + $0x19] ss:$0 sm:$0xff]
        %v1714 = vld [vmem:[#allocation4 + $0x1a] ss:$0 sm:$0xff]
        %1715 = vmatpush.msra.mxu0 0.0
        %1716 = vmatpush.msra.mxu0 0.0
        %1717 = vmatpush.msra.mxu0 0.0
        %1718 = vmatpush.msra.mxu0 0.0
        %1719 = vmatpush.msra.mxu0 0.0
        %1720 = vmatpush.msra.mxu0 0.0
        %1721 = vmatpush.msra.mxu0 0.0
        %1722 = vmatpush.msra.mxu0 0.0
        %1723 = vmatpush.msra.mxu0 %v1711
        %1724 = vmatpush.msra.mxu0 %v1708
        %1725 = vmatpush.msra.mxu0 %v1705
        %1726 = vmatpush.msra.mxu0 %v1702
        %1727 = vmatpush.msra.mxu0 %v1699
        %1728 = vmatpush.msra.mxu0 %v1696
        %1729 = vmatpush.msra.mxu0 %v1693
        %1730 = vmatpush.msra.mxu0 %v1690
        %1731 = vmatmul.f32.gmra.mxu0 %v324
        %v1732 = vpop.f32.mrf.mxu0
        %v1733 = vadd.f32 0.0, %v1732
        %1734 = vdwg.mxu0
        %v1735 = vmul.f32 %v1690, %v1690
        %v1736 = vmul.f32 %v1693, %v1693
        %v1737 = vmul.f32 %v1696, %v1696
        %v1738 = vmul.f32 %v1699, %v1699
        %v1739 = vmul.f32 %v1702, %v1702
        %v1740 = vmul.f32 %v1705, %v1705
        %v1741 = vmul.f32 %v1708, %v1708
        %v1742 = vmul.f32 %v1711, %v1711
        %1743 = vmatpush.msra.mxu0 0.0
        %1744 = vmatpush.msra.mxu0 0.0
        %1745 = vmatpush.msra.mxu0 0.0
        %1746 = vmatpush.msra.mxu0 0.0
        %1747 = vmatpush.msra.mxu0 0.0
        %1748 = vmatpush.msra.mxu0 0.0
        %1749 = vmatpush.msra.mxu0 0.0
        %1750 = vmatpush.msra.mxu0 0.0
        %1751 = vmatpush.msra.mxu0 %v1742
        %1752 = vmatpush.msra.mxu0 %v1741
        %1753 = vmatpush.msra.mxu0 %v1740
        %1754 = vmatpush.msra.mxu0 %v1739
        %1755 = vmatpush.msra.mxu0 %v1738
        %1756 = vmatpush.msra.mxu0 %v1737
        %1757 = vmatpush.msra.mxu0 %v1736
        %1758 = vmatpush.msra.mxu0 %v1735
        %1759 = vmatmul.f32.gmra.mxu0 %v324
        %v1760 = vpop.f32.mrf.mxu0
        %v1761 = vadd.f32 0.0, %v1760
        %1762 = vdwg.mxu0
        %v1763 = vmul.f32 %v1733, 0.015625
        %v1764 = vmul.f32 %v1761, 0.015625
        %v1765 = vmul.f32 %v1763, %v1763
        %v1766 = vsub.f32 %v1764, %v1765
        %v1767 = vmax.f32 %v1766, 0.0
        %v1768 = vadd.f32 %v1767, 1e-05
        %v1769 = vrsqrt.pop %v1768
        %v1770 = vmul.f32 %v1769, %v1768
        %v1771 = vmul.f32 %v1770, %v1769
        %v1772 = vmul.f32 0.5, %v1771
        %v1773 = vsub.f32 1.5, %v1772
        %v1774 = vmul.f32 %v1769, %v1773
        %vm1775 = vweird.f32 %v1768
        %vm1776 = vweird.f32 %v1769
        %vm1777 = vmor %vm1775, %vm1776
        %v1778 = vsel %vm1777, %v1769, %v1774
        %v1779 = vmul.f32 %v1713, %v1778
        %v1780 = vmul.f32 %v1763, %v1779
        %v1781 = vsub.f32 %v1714, %v1780
        %v1782 = vperm.slane %v1779, 0
        %v1783 = vmul.f32 %v1690, %v1782
        %v1784 = vmul.f32 %v1693, %v1782
        %v1785 = vmul.f32 %v1696, %v1782
        %v1786 = vmul.f32 %v1699, %v1782
        %v1787 = vmul.f32 %v1702, %v1782
        %v1788 = vmul.f32 %v1705, %v1782
        %v1789 = vmul.f32 %v1708, %v1782
        %v1790 = vmul.f32 %v1711, %v1782
        %v1791 = vperm.slane %v1781, 0
        %v1792 = vadd.f32 %v1783, %v1791
        %v1793 = vadd.f32 %v1784, %v1791
        %v1794 = vadd.f32 %v1785, %v1791
        %v1795 = vadd.f32 %v1786, %v1791
        %v1796 = vadd.f32 %v1787, %v1791
        %v1797 = vadd.f32 %v1788, %v1791
        %v1798 = vadd.f32 %v1789, %v1791
        %v1799 = vadd.f32 %v1790, %v1791
        %v1800 = vtanh.pop %v1792
        %v1801 = vtanh.pop %v1793
        %v1802 = vtanh.pop %v1794
        %v1803 = vtanh.pop %v1795
        %v1804 = vtanh.pop %v1796
        %v1805 = vtanh.pop %v1797
        %v1806 = vtanh.pop %v1798
        %v1807 = vtanh.pop %v1799
        %v1808 = vld [vmem:[#allocation2 + $0xf18] sm:$0xff]
        %v1809 = vld [vmem:[#allocation2 + $0xf30] sm:$0xff]
        %v1810 = vld [vmem:[#allocation2 + $0xf48] sm:$0xff]
        %v1811 = vld [vmem:[#allocation2 + $0xf60] sm:$0xff]
        %v1812 = vld [vmem:[#allocation2 + $0xf78] sm:$0xff]
        %v1813 = vld [vmem:[#allocation2 + $0xf90] sm:$0xff]
        %v1814 = vld [vmem:[#allocation2 + $0xfa8] sm:$0xff]
        %v1815 = vld [vmem:[#allocation2 + $0xfc0] sm:$0xff]
        %v1816 = vld [vmem:[#allocation2 + $0xfd8] sm:$0xff]
        %v1817 = vld [vmem:[#allocation2 + $0xff0] sm:$0xff]
        %v1818 = vld [vmem:[#allocation2 + $0x1008] sm:$0xff]
        %v1819 = vld [vmem:[#allocation2 + $0x1020] sm:$0xff]
        %v1820 = vld [vmem:[#allocation2 + $0x1038] sm:$0xff]
        %v1821 = vld [vmem:[#allocation2 + $0x1050] sm:$0xff]
        %v1822 = vld [vmem:[#allocation2 + $0x1068] sm:$0xff]
        %v1823 = vld [vmem:[#allocation2 + $0x1080] sm:$0xff]
        %1824 = vmatpush.msra.mxu0 %v1823
        %1825 = vmatpush.msra.mxu0 %v1822
        %1826 = vmatpush.msra.mxu0 %v1821
        %1827 = vmatpush.msra.mxu0 %v1820
        %1828 = vmatpush.msra.mxu0 %v1819
        %1829 = vmatpush.msra.mxu0 %v1818
        %1830 = vmatpush.msra.mxu0 %v1817
        %1831 = vmatpush.msra.mxu0 %v1816
        %1832 = vmatpush.msra.mxu0 %v1815
        %1833 = vmatpush.msra.mxu0 %v1814
        %1834 = vmatpush.msra.mxu0 %v1813
        %1835 = vmatpush.msra.mxu0 %v1812
        %1836 = vmatpush.msra.mxu0 %v1811
        %1837 = vmatpush.msra.mxu0 %v1810
        %1838 = vmatpush.msra.mxu0 %v1809
        %1839 = vmatpush.msra.mxu0 %v1808
        %1840 = vmatmul.f32.gmra.mxu0 %v1800
        %v1841 = vpop.f32.mrf.mxu0
        %v1842 = vadd.f32 0.0, %v1841
        %1843 = vmatmul.f32.gmra.mxu0 %v1801
        %v1844 = vpop.f32.mrf.mxu0
        %v1845 = vadd.f32 0.0, %v1844
        %1846 = vmatmul.f32.gmra.mxu0 %v1802
        %v1847 = vpop.f32.mrf.mxu0
        %v1848 = vadd.f32 0.0, %v1847
        %1849 = vmatmul.f32.gmra.mxu0 %v1803
        %v1850 = vpop.f32.mrf.mxu0
        %v1851 = vadd.f32 0.0, %v1850
        %1852 = vmatmul.f32.gmra.mxu0 %v1804
        %v1853 = vpop.f32.mrf.mxu0
        %v1854 = vadd.f32 0.0, %v1853
        %1855 = vmatmul.f32.gmra.mxu0 %v1805
        %v1856 = vpop.f32.mrf.mxu0
        %v1857 = vadd.f32 0.0, %v1856
        %1858 = vmatmul.f32.gmra.mxu0 %v1806
        %v1859 = vpop.f32.mrf.mxu0
        %v1860 = vadd.f32 0.0, %v1859
        %1861 = vmatmul.f32.gmra.mxu0 %v1807
        %v1862 = vpop.f32.mrf.mxu0
        %v1863 = vadd.f32 0.0, %v1862
        %1864 = vdwg.mxu0
        %v1865 = vld [vmem:[#allocation4 + $0x1b] ss:$0 sm:$0xff]
        %v1866 = vld [vmem:[#allocation4 + $0x1c] ss:$0 sm:$0xff]
        %1867 = vmatpush.msra.mxu0 0.0
        %1868 = vmatpush.msra.mxu0 0.0
        %1869 = vmatpush.msra.mxu0 0.0
        %1870 = vmatpush.msra.mxu0 0.0
        %1871 = vmatpush.msra.mxu0 0.0
        %1872 = vmatpush.msra.mxu0 0.0
        %1873 = vmatpush.msra.mxu0 0.0
        %1874 = vmatpush.msra.mxu0 0.0
        %1875 = vmatpush.msra.mxu0 %v1863
        %1876 = vmatpush.msra.mxu0 %v1860
        %1877 = vmatpush.msra.mxu0 %v1857
        %1878 = vmatpush.msra.mxu0 %v1854
        %1879 = vmatpush.msra.mxu0 %v1851
        %1880 = vmatpush.msra.mxu0 %v1848
        %1881 = vmatpush.msra.mxu0 %v1845
        %1882 = vmatpush.msra.mxu0 %v1842
        %1883 = vmatmul.f32.gmra.mxu0 %v324
        %v1884 = vpop.f32.mrf.mxu0
        %v1885 = vadd.f32 0.0, %v1884
        %1886 = vdwg.mxu0
        %v1887 = vmul.f32 %v1842, %v1842
        %v1888 = vmul.f32 %v1845, %v1845
        %v1889 = vmul.f32 %v1848, %v1848
        %v1890 = vmul.f32 %v1851, %v1851
        %v1891 = vmul.f32 %v1854, %v1854
        %v1892 = vmul.f32 %v1857, %v1857
        %v1893 = vmul.f32 %v1860, %v1860
        %v1894 = vmul.f32 %v1863, %v1863
        %1895 = vmatpush.msra.mxu0 0.0
        %1896 = vmatpush.msra.mxu0 0.0
        %1897 = vmatpush.msra.mxu0 0.0
        %1898 = vmatpush.msra.mxu0 0.0
        %1899 = vmatpush.msra.mxu0 0.0
        %1900 = vmatpush.msra.mxu0 0.0
        %1901 = vmatpush.msra.mxu0 0.0
        %1902 = vmatpush.msra.mxu0 0.0
        %1903 = vmatpush.msra.mxu0 %v1894
        %1904 = vmatpush.msra.mxu0 %v1893
        %1905 = vmatpush.msra.mxu0 %v1892
        %1906 = vmatpush.msra.mxu0 %v1891
        %1907 = vmatpush.msra.mxu0 %v1890
        %1908 = vmatpush.msra.mxu0 %v1889
        %1909 = vmatpush.msra.mxu0 %v1888
        %1910 = vmatpush.msra.mxu0 %v1887
        %1911 = vmatmul.f32.gmra.mxu0 %v324
        %v1912 = vpop.f32.mrf.mxu0
        %v1913 = vadd.f32 0.0, %v1912
        %1914 = vdwg.mxu0
        %v1915 = vmul.f32 %v1885, 0.015625
        %v1916 = vmul.f32 %v1913, 0.015625
        %v1917 = vmul.f32 %v1915, %v1915
        %v1918 = vsub.f32 %v1916, %v1917
        %v1919 = vmax.f32 %v1918, 0.0
        %v1920 = vadd.f32 %v1919, 1e-05
        %v1921 = vrsqrt.pop %v1920
        %v1922 = vmul.f32 %v1921, %v1920
        %v1923 = vmul.f32 %v1922, %v1921
        %v1924 = vmul.f32 0.5, %v1923
        %v1925 = vsub.f32 1.5, %v1924
        %v1926 = vmul.f32 %v1921, %v1925
        %vm1927 = vweird.f32 %v1920
        %vm1928 = vweird.f32 %v1921
        %vm1929 = vmor %vm1927, %vm1928
        %v1930 = vsel %vm1929, %v1921, %v1926
        %v1931 = vmul.f32 %v1865, %v1930
        %v1932 = vmul.f32 %v1915, %v1931
        %v1933 = vsub.f32 %v1866, %v1932
        %v1934 = vperm.slane %v1931, 0
        %v1935 = vmul.f32 %v1842, %v1934
        %v1936 = vmul.f32 %v1845, %v1934
        %v1937 = vmul.f32 %v1848, %v1934
        %v1938 = vmul.f32 %v1851, %v1934
        %v1939 = vmul.f32 %v1854, %v1934
        %v1940 = vmul.f32 %v1857, %v1934
        %v1941 = vmul.f32 %v1860, %v1934
        %v1942 = vmul.f32 %v1863, %v1934
        %v1943 = vperm.slane %v1933, 0
        %v1944 = vadd.f32 %v1935, %v1943
        %v1945 = vadd.f32 %v1936, %v1943
        %v1946 = vadd.f32 %v1937, %v1943
        %v1947 = vadd.f32 %v1938, %v1943
        %v1948 = vadd.f32 %v1939, %v1943
        %v1949 = vadd.f32 %v1940, %v1943
        %v1950 = vadd.f32 %v1941, %v1943
        %v1951 = vadd.f32 %v1942, %v1943
        %v1952 = vxor.u32 %v1944, 2147483648
        %v1953 = vxor.u32 %v1945, 2147483648
        %v1954 = vxor.u32 %v1946, 2147483648
        %v1955 = vxor.u32 %v1947, 2147483648
        %v1956 = vxor.u32 %v1948, 2147483648
        %v1957 = vxor.u32 %v1949, 2147483648
        %v1958 = vxor.u32 %v1950, 2147483648
        %v1959 = vxor.u32 %v1951, 2147483648
        %v1960 = vmul.f32 %v1952, 1.442695
        %v1961 = vpow.pop %v1960
        %v1962 = vmul.f32 %v1953, 1.442695
        %v1963 = vpow.pop %v1962
        %v1964 = vmul.f32 %v1954, 1.442695
        %v1965 = vpow.pop %v1964
        %v1966 = vmul.f32 %v1955, 1.442695
        %v1967 = vpow.pop %v1966
        %v1968 = vmul.f32 %v1956, 1.442695
        %v1969 = vpow.pop %v1968
        %v1970 = vmul.f32 %v1957, 1.442695
        %v1971 = vpow.pop %v1970
        %v1972 = vmul.f32 %v1958, 1.442695
        %v1973 = vpow.pop %v1972
        %v1974 = vmul.f32 %v1959, 1.442695
        %v1975 = vpow.pop %v1974
        %v1976 = vadd.f32 %v1961, 1.0
        %v1977 = vadd.f32 %v1963, 1.0
        %v1978 = vadd.f32 %v1965, 1.0
        %v1979 = vadd.f32 %v1967, 1.0
        %v1980 = vadd.f32 %v1969, 1.0
        %v1981 = vadd.f32 %v1971, 1.0
        %v1982 = vadd.f32 %v1973, 1.0
        %v1983 = vadd.f32 %v1975, 1.0
        %v1984 = vrcp.pop %v1976
        %v1985 = vmul.f32 %v1976, %v1984
        %v1986 = vsub.f32 1.0, %v1985
        %v1987 = vmul.f32 %v1984, %v1986
        %v1988 = vadd.f32 %v1984, %v1987
        %vm1989 = vweird.f32 %v1976
        %vm1990 = vweird.f32 %v1984
        %vm1991 = vmor %vm1989, %vm1990
        %v1992 = vsel %vm1991, %v1984, %v1988
        %v1993 = vand.u32 2147483647, %v1976
        %vm1994 = vcmp.eq.f32.partialorder %v1993, 8.507059e+37
        %v1995 = vand.u32 %v1976, 2147483648
        %v1996 = vor.u32 1.1754944e-38, %v1995
        %v1997 = vsel %vm1994, %v1996, %v1992
        %v1998 = vmul.f32 1.0, %v1997
        %v1999 = vrcp.pop %v1977
        %v2000 = vmul.f32 %v1977, %v1999
        %v2001 = vsub.f32 1.0, %v2000
        %v2002 = vmul.f32 %v1999, %v2001
        %v2003 = vadd.f32 %v1999, %v2002
        %vm2004 = vweird.f32 %v1977
        %vm2005 = vweird.f32 %v1999
        %vm2006 = vmor %vm2004, %vm2005
        %v2007 = vsel %vm2006, %v1999, %v2003
        %v2008 = vand.u32 2147483647, %v1977
        %vm2009 = vcmp.eq.f32.partialorder %v2008, 8.507059e+37
        %v2010 = vand.u32 %v1977, 2147483648
        %v2011 = vor.u32 1.1754944e-38, %v2010
        %v2012 = vsel %vm2009, %v2011, %v2007
        %v2013 = vmul.f32 1.0, %v2012
        %v2014 = vrcp.pop %v1978
        %v2015 = vmul.f32 %v1978, %v2014
        %v2016 = vsub.f32 1.0, %v2015
        %v2017 = vmul.f32 %v2014, %v2016
        %v2018 = vadd.f32 %v2014, %v2017
        %vm2019 = vweird.f32 %v1978
        %vm2020 = vweird.f32 %v2014
        %vm2021 = vmor %vm2019, %vm2020
        %v2022 = vsel %vm2021, %v2014, %v2018
        %v2023 = vand.u32 2147483647, %v1978
        %vm2024 = vcmp.eq.f32.partialorder %v2023, 8.507059e+37
        %v2025 = vand.u32 %v1978, 2147483648
        %v2026 = vor.u32 1.1754944e-38, %v2025
        %v2027 = vsel %vm2024, %v2026, %v2022
        %v2028 = vmul.f32 1.0, %v2027
        %v2029 = vrcp.pop %v1979
        %v2030 = vmul.f32 %v1979, %v2029
        %v2031 = vsub.f32 1.0, %v2030
        %v2032 = vmul.f32 %v2029, %v2031
        %v2033 = vadd.f32 %v2029, %v2032
        %vm2034 = vweird.f32 %v1979
        %vm2035 = vweird.f32 %v2029
        %vm2036 = vmor %vm2034, %vm2035
        %v2037 = vsel %vm2036, %v2029, %v2033
        %v2038 = vand.u32 2147483647, %v1979
        %vm2039 = vcmp.eq.f32.partialorder %v2038, 8.507059e+37
        %v2040 = vand.u32 %v1979, 2147483648
        %v2041 = vor.u32 1.1754944e-38, %v2040
        %v2042 = vsel %vm2039, %v2041, %v2037
        %v2043 = vmul.f32 1.0, %v2042
        %v2044 = vrcp.pop %v1980
        %v2045 = vmul.f32 %v1980, %v2044
        %v2046 = vsub.f32 1.0, %v2045
        %v2047 = vmul.f32 %v2044, %v2046
        %v2048 = vadd.f32 %v2044, %v2047
        %vm2049 = vweird.f32 %v1980
        %vm2050 = vweird.f32 %v2044
        %vm2051 = vmor %vm2049, %vm2050
        %v2052 = vsel %vm2051, %v2044, %v2048
        %v2053 = vand.u32 2147483647, %v1980
        %vm2054 = vcmp.eq.f32.partialorder %v2053, 8.507059e+37
        %v2055 = vand.u32 %v1980, 2147483648
        %v2056 = vor.u32 1.1754944e-38, %v2055
        %v2057 = vsel %vm2054, %v2056, %v2052
        %v2058 = vmul.f32 1.0, %v2057
        %v2059 = vrcp.pop %v1981
        %v2060 = vmul.f32 %v1981, %v2059
        %v2061 = vsub.f32 1.0, %v2060
        %v2062 = vmul.f32 %v2059, %v2061
        %v2063 = vadd.f32 %v2059, %v2062
        %vm2064 = vweird.f32 %v1981
        %vm2065 = vweird.f32 %v2059
        %vm2066 = vmor %vm2064, %vm2065
        %v2067 = vsel %vm2066, %v2059, %v2063
        %v2068 = vand.u32 2147483647, %v1981
        %vm2069 = vcmp.eq.f32.partialorder %v2068, 8.507059e+37
        %v2070 = vand.u32 %v1981, 2147483648
        %v2071 = vor.u32 1.1754944e-38, %v2070
        %v2072 = vsel %vm2069, %v2071, %v2067
        %v2073 = vmul.f32 1.0, %v2072
        %v2074 = vrcp.pop %v1982
        %v2075 = vmul.f32 %v1982, %v2074
        %v2076 = vsub.f32 1.0, %v2075
        %v2077 = vmul.f32 %v2074, %v2076
        %v2078 = vadd.f32 %v2074, %v2077
        %vm2079 = vweird.f32 %v1982
        %vm2080 = vweird.f32 %v2074
        %vm2081 = vmor %vm2079, %vm2080
        %v2082 = vsel %vm2081, %v2074, %v2078
        %v2083 = vand.u32 2147483647, %v1982
        %vm2084 = vcmp.eq.f32.partialorder %v2083, 8.507059e+37
        %v2085 = vand.u32 %v1982, 2147483648
        %v2086 = vor.u32 1.1754944e-38, %v2085
        %v2087 = vsel %vm2084, %v2086, %v2082
        %v2088 = vmul.f32 1.0, %v2087
        %v2089 = vrcp.pop %v1983
        %v2090 = vmul.f32 %v1983, %v2089
        %v2091 = vsub.f32 1.0, %v2090
        %v2092 = vmul.f32 %v2089, %v2091
        %v2093 = vadd.f32 %v2089, %v2092
        %vm2094 = vweird.f32 %v1983
        %vm2095 = vweird.f32 %v2089
        %vm2096 = vmor %vm2094, %vm2095
        %v2097 = vsel %vm2096, %v2089, %v2093
        %v2098 = vand.u32 2147483647, %v1983
        %vm2099 = vcmp.eq.f32.partialorder %v2098, 8.507059e+37
        %v2100 = vand.u32 %v1983, 2147483648
        %v2101 = vor.u32 1.1754944e-38, %v2100
        %v2102 = vsel %vm2099, %v2101, %v2097
        %v2103 = vmul.f32 1.0, %v2102
        %vm2104 = vcmask 130048
        %2105 = vst.msk [vmem:[%s239] sm:$0xff] %vm2104, %v1196
        %2106 = vst.msk [vmem:[%s239 + $0x8] sm:$0xff] %vm2104, %v1199
        %2107 = vst.msk [vmem:[%s239 + $0x10] sm:$0xff] %vm2104, %v1202
        %2108 = vst.msk [vmem:[%s239 + $0x18] sm:$0xff] %vm2104, %v1205
        %2109 = vst.msk [vmem:[%s239 + $0x20] sm:$0xff] %vm2104, %v1208
        %2110 = vst.msk [vmem:[%s239 + $0x28] sm:$0xff] %vm2104, %v1211
        %2111 = vst.msk [vmem:[%s239 + $0x30] sm:$0xff] %vm2104, %v1214
        %2112 = vst.msk [vmem:[%s239 + $0x38] sm:$0xff] %vm2104, %v1217
        %vm2113 = vcmask 48128
        %2114 = vst.msk [vmem:[%s244] sm:$0xff] %vm2113, %v1998
        %2115 = vst.msk [vmem:[%s244 + $0x8] sm:$0xff] %vm2113, %v2013
        %2116 = vst.msk [vmem:[%s244 + $0x10] sm:$0xff] %vm2113, %v2028
        %2117 = vst.msk [vmem:[%s244 + $0x18] sm:$0xff] %vm2113, %v2043
        %2118 = vst.msk [vmem:[%s244 + $0x20] sm:$0xff] %vm2113, %v2058
        %2119 = vst.msk [vmem:[%s244 + $0x28] sm:$0xff] %vm2113, %v2073
        %2120 = vst.msk [vmem:[%s244 + $0x30] sm:$0xff] %vm2113, %v2088
        %2121 = vst.msk [vmem:[%s244 + $0x38] sm:$0xff] %vm2113, %v2103
        %p2122 = scmp.lt.s32.totalorder %s18, 3
        %s2123 = scalar_select %p2122, %s18, 3
        %s2124 = smul.addr %s2123, 8
        %s2125 = smul.addr %s2124, 8
        %s2126 = scalar_lea.vmem %s3, %s2125
        %p2127 = scmp.lt.s32.totalorder %s18, 3
        %s2128 = scalar_select %p2127, %s18, 3
        %s2129 = smul.addr %s2128, 8
        %s2130 = smul.addr %s2129, 8
        %s2131 = scalar_lea.vmem %s4, %s2130
        // Predicated region
        $region41: #{autoencoder_forward.1} parent=31 // pred_check
          %p2132 = pneg %p104
        $region42: #{autoencoder_forward.1} parent=31 // pred_check_branch
          %2134 = sbr.rel (%p2132) target = $region44
        $region43: #{autoencoder_forward.1} parent=31 // pred_region
          _
        $region44: #{autoencoder_forward.1} parent=31 // pred_fallthru
          _
        // Predicated region
        $region45: #{autoencoder_forward.1} parent=31 // pred_check
          %p2135 = pneg %p130
        $region46: #{autoencoder_forward.1} parent=31 // pred_check_branch
          %2137 = sbr.rel (%p2135) target = $region48
        $region47: #{autoencoder_forward.1} parent=31 // pred_region
          _
        $region48: #{autoencoder_forward.1} parent=31 // pred_fallthru
          _
      $region32: #{autoencoder_forward.1} parent=5 // pred_fallthru
        _
      %p2138 = scmp.le.s32.totalorder 2, %s13
      // Predicated region
      $region49: #{autoencoder_forward.1} parent=5 // pred_check
        %p2139 = pneg %p2138
      $region50: #{autoencoder_forward.1} parent=5 // pred_check_branch
        %2141 = sbr.rel (%p2139) target = $region52
      $region51: #{autoencoder_forward.1} parent=5 // pred_region
        %s2142 = ssub.s32 %s13, 2
        // Predicated region
        $region53: #{autoencoder_forward.1} parent=51 // pred_check
          %p2143 = pneg %p110
        $region54: #{autoencoder_forward.1} parent=51 // pred_check_branch
          %2145 = sbr.rel (%p2143) target = $region56
        $region55: #{autoencoder_forward.1} parent=51 // pred_region
          %p2146 = scmp.lt.s32.totalorder %s19, 3
          %s2147 = scalar_select %p2146, %s19, 3
          %s2148 = smul.addr %s2147, 8
          %s2149 = smul.addr %s2148, 8
          %s2150 = scalar_lea.vmem %s3, %s2149
        $region56: #{autoencoder_forward.1} parent=51 // pred_fallthru
          _
        // Predicated region
        $region57: #{autoencoder_forward.1} parent=51 // pred_check
          %p2151 = pneg %p136
        $region58: #{autoencoder_forward.1} parent=51 // pred_check_branch
          %2153 = sbr.rel (%p2151) target = $region60
        $region59: #{autoencoder_forward.1} parent=51 // pred_region
          %p2154 = scmp.lt.s32.totalorder %s19, 3
          %s2155 = scalar_select %p2154, %s19, 3
          %s2156 = smul.addr %s2155, 8
          %s2157 = smul.addr %s2156, 8
          %s2158 = scalar_lea.vmem %s4, %s2157
        $region60: #{autoencoder_forward.1} parent=51 // pred_fallthru
          _
      $region52: #{autoencoder_forward.1} parent=5 // pred_fallthru
        _
    $region6: #{autoencoder_forward.1} parent=1 // loop_footer
      %s17 = sadd.s32 1, %s13
    $region7: #{autoencoder_forward.1} parent=1 // loop_footer_branch
      %12 = sbr.rel target = $region3
    $region8: #{autoencoder_forward.1} parent=1 // loop_exit
      _
    %2159 = vsyncpa [#allocation3], 1
    %s2160 = scalar_lea.sflag [#allocation3], 1
    %2161 = vsyncpa %s2160, 1
    %2162 = vsyncpa [#allocation5], 1

</llo_original>
